<compile_context>
chip_gen: v6e
topology: v6e:2x2x1
jax: 0.10.0
libtpu: 0.0.40
codegen_flags: <defaults>
</compile_context>

<pallas_src>
import jax
import jax.numpy as jnp
from jax.experimental import pallas as pl
from jax.experimental.pallas import tpu as pltpu

HIDDEN1 = 16   # GCNConv out / first FC width
HIDDEN2 = 16
HIDDEN3 = 32
OUT_LANES = 128  # lane-dense output slab; lane 0 holds the prediction


def _round_up(x, m):
    return (x + m - 1) // m * m


def _vmem_capacity_bytes():
    """Best-effort physical VMEM query; conservative (v7x-sized) fallback."""
    try:
        info = pltpu.get_tpu_info()
        for attr in ("vmem_capacity_bytes", "vmem_size_bytes", "vmem_bytes"):
            v = getattr(info, attr, None)
            if v:
                return int(v)
    except Exception:
        pass
    return 64 * 1024 * 1024


def _select_tiles(n):
    """Per-generation tile sizes. Returns (tm, tk, n_pad, vmem_limit_bytes)."""
    n128 = _round_up(max(n, 1), 128)
    vmem_cap = _vmem_capacity_bytes()
    if vmem_cap >= 96 * 1024 * 1024:
        # v5e / v6e: 128 MiB physical VMEM -> big, wide tiles.
        tm_target, tk_target = 1024, 4096
        vmem_limit = 64 * 1024 * 1024
    else:
        # v7x (or unknown): 64 MiB physical -> keep double-buffered A <= ~8 MiB.
        tm_target, tk_target = 1024, 2048
        vmem_limit = 48 * 1024 * 1024

    tk = min(tk_target, n128)              # multiple of 128; == n_pad for small N
    n_pad = _round_up(max(n, 1), tk)       # tk | n_pad

    cands = [t for t in range(128, min(tm_target, n_pad) + 1, 128)
             if n_pad % t == 0]
    # Prefer >= 2 row tiles so the "parallel" axis feeds both v7x TensorCores.
    multi = [t for t in cands if n_pad // t >= 2]
    tm = max(multi) if multi else max(cands)
    return tm, tk, n_pad, vmem_limit


# ---------------------------------------------------------------------------
# Glue: O(E) normalization pieces + padded bf16 (A+I) build
# ---------------------------------------------------------------------------

def build_adjacency_and_dinv(edge_index, num_nodes, n_pad):
    """Padded bf16 (A+I) built directly, plus f32 D^-1/2 (PyG gcn_norm deg)."""
    src = edge_index[0]
    dst = edge_index[1]
    one = jnp.bfloat16(1.0)

    a = jnp.zeros((n_pad, n_pad), jnp.bfloat16)
    a = a.at[dst, src].add(one)                       # aggregate source -> target
    diag = jnp.arange(num_nodes, dtype=jnp.int32)
    a = a.at[diag, diag].add(one)                     # self-loops

    # Degree of (A+I) rows computed O(E), in f32 (no N^2 pass).
    deg = jnp.zeros((num_nodes,), jnp.float32).at[dst].add(1.0) + 1.0
    dinv = jnp.where(deg > 0, 1.0 / jnp.sqrt(deg), 0.0)
    dinv_pad = jnp.pad(dinv, (0, n_pad - num_nodes))  # padded rows -> 0
    return a, dinv_pad


def init_params(key, node_features):
    """Deterministic synthetic parameters matching the PyTorch module's shapes."""
    ks = jax.random.split(key, 8)

    def u(k, shape, fan_in):
        bound = 1.0 / jnp.sqrt(fan_in)
        return jax.random.uniform(k, shape, jnp.float32, -bound, bound)

    return {
        "w1": u(ks[0], (HIDDEN1, node_features), node_features),
        "b1": u(ks[1], (1, HIDDEN1), node_features),
        "w2": u(ks[2], (HIDDEN2, HIDDEN1), HIDDEN1),
        "b2": u(ks[3], (1, HIDDEN2), HIDDEN1),
        "w3": u(ks[4], (HIDDEN3, HIDDEN2), HIDDEN2),
        "b3": u(ks[5], (1, HIDDEN3), HIDDEN2),
        "w4": u(ks[6], (1, HIDDEN3), HIDDEN3),
        "b4": u(ks[7], (1, 1), HIDDEN3),
    }


# ---------------------------------------------------------------------------
# Forward wrapper + kernel
# ---------------------------------------------------------------------------

def gcn_homo_forward(x, edge_index, params):
    n, f = x.shape
    tm, tk, n_pad, vmem_limit = _select_tiles(n)

    a_pad, dinv_pad = build_adjacency_and_dinv(edge_index, n, n_pad)
    dinv_col = dinv_pad[:, None]                                   # (n_pad, 1) f32

    x_pad = jnp.pad(x, ((0, n_pad - n), (0, 0)))
    w1t = params["w1"].T.astype(jnp.float32)                       # (F, 16)

    if f <= HIDDEN1:
        # Aggregate raw (scaled) features; project by W1^T after aggregation.
        h0 = x_pad                                                 # (n_pad, F)
        w_post = w1t                                               # (F, 16)
    else:
        # Project first (plain XLA, fuses with pad/cast) so the big matmul is 16-wide.
        h0 = x_pad @ w1t                                           # (n_pad, 16)
        w_post = jnp.eye(HIDDEN1, dtype=jnp.float32)
    # Fold the column-side D^-1/2 into H (row-side applied in the kernel).
    h_scaled = (dinv_col * h0).astype(jnp.bfloat16)                # (n_pad, f_agg)
    f_agg = h_scaled.shape[1]

    grid = (n_pad // tm, n_pad // tk)
    TK = tk  # static python int, closed over by the kernel

    def kernel(a_ref, h_ref, dinv_ref,
               w1t_ref, b1_ref, w2t_ref, b2_ref, w3t_ref, b3_ref,
               w4_ref, b4_ref, o_ref, acc_ref):
        k = pl.program_id(1)

        @pl.when(k == 0)
        def _():
            acc_ref[...] = jnp.zeros_like(acc_ref)

        # Dominant matmul: bf16 (A+I) tile x bf16 resident-H slice, f32 accumulate.
        k_start = pl.multiple_of(k * TK, TK)
        h_blk = h_ref[pl.ds(k_start, TK), :]
        acc_ref[...] += jnp.dot(a_ref[...], h_blk,
                                preferred_element_type=jnp.float32)

        @pl.when(k == pl.num_programs(1) - 1)
        def _():
            # Row-side D^-1/2 folded in here (f32, no precision loss).
            h = acc_ref[...] * dinv_ref[...]
            # GCNConv projection + bias + ReLU.
            h = jnp.dot(h, w1t_ref[...], preferred_element_type=jnp.float32) + b1_ref[...]
            h = jnp.maximum(h, 0.0)
            # Linear(16 -> 16) + ReLU
            h = jnp.dot(h, w2t_ref[...], preferred_element_type=jnp.float32) + b2_ref[...]
            h = jnp.maximum(h, 0.0)
            # Linear(16 -> 32) + ReLU
            h = jnp.dot(h, w3t_ref[...], preferred_element_type=jnp.float32) + b3_ref[...]
            h = jnp.maximum(h, 0.0)
            # Linear(32 -> 1): VPU multiply + lane reduction (avoids 1-lane MXU pass).
            z = jnp.sum(h * w4_ref[...], axis=-1, keepdims=True) + b4_ref[...]
            o_ref[...] = jnp.broadcast_to(jax.nn.sigmoid(z), o_ref.shape)

    flops = 2.0 * n_pad * n_pad * f_agg + 2.0 * n_pad * (
        f_agg * HIDDEN1 + HIDDEN1 * HIDDEN2 + HIDDEN2 * HIDDEN3 + HIDDEN3)
    bytes_accessed = int(n_pad * n_pad * 2            # A+I, streamed once
                         + n_pad * f_agg * 2          # resident H, loaded once
                         + n_pad * 4                  # dinv
                         + n_pad * OUT_LANES * 4      # output slab
                         + 8192)                      # weights/biases
    cost = pl.CostEstimate(flops=int(flops),
                           transcendentals=int(n_pad),
                           bytes_accessed=bytes_accessed)

    out = pl.pallas_call(
        kernel,
        out_shape=jax.ShapeDtypeStruct((n_pad, OUT_LANES), jnp.float32),
        grid_spec=pltpu.PrefetchScalarGridSpec(
            num_scalar_prefetch=0,
            grid=grid,
            in_specs=[
                pl.BlockSpec((tm, tk), lambda i, k: (i, k)),           # (A+I) tile
                pl.BlockSpec((n_pad, f_agg), lambda i, k: (0, 0)),     # H resident
                pl.BlockSpec((tm, 1), lambda i, k: (i, 0)),            # dinv row tile
                pl.BlockSpec((f_agg, HIDDEN1), lambda i, k: (0, 0)),   # W1^T / eye
                pl.BlockSpec((1, HIDDEN1), lambda i, k: (0, 0)),       # b1
                pl.BlockSpec((HIDDEN1, HIDDEN2), lambda i, k: (0, 0)),  # W2^T
                pl.BlockSpec((1, HIDDEN2), lambda i, k: (0, 0)),       # b2
                pl.BlockSpec((HIDDEN2, HIDDEN3), lambda i, k: (0, 0)),  # W3^T
                pl.BlockSpec((1, HIDDEN3), lambda i, k: (0, 0)),       # b3
                pl.BlockSpec((1, HIDDEN3), lambda i, k: (0, 0)),       # w4 row
                pl.BlockSpec((1, 1), lambda i, k: (0, 0)),             # b4
            ],
            out_specs=pl.BlockSpec((tm, OUT_LANES), lambda i, k: (i, 0)),
            scratch_shapes=[pltpu.VMEM((tm, f_agg), jnp.float32)],
        ),
        compiler_params=pltpu.CompilerParams(
            dimension_semantics=("parallel", "arbitrary"),
            vmem_limit_bytes=vmem_limit,
        ),
        cost_estimate=cost,
    )(
        a_pad, h_scaled, dinv_col,
        w_post, params["b1"],
        params["w2"].T, params["b2"],
        params["w3"].T, params["b3"],
        params["w4"], params["b4"],
    )
    return out[:n, :1]


def reference_forward(x, edge_index, params):
    """Plain-JAX f32 reference with the original module's math."""
    n = x.shape[0]
    src, dst = edge_index[0], edge_index[1]
    a = jnp.zeros((n, n), jnp.float32).at[dst, src].add(1.0) + jnp.eye(n, dtype=jnp.float32)
    deg = a.sum(axis=1)
    dinv = jnp.where(deg > 0, 1.0 / jnp.sqrt(deg), 0.0)
    a_hat = dinv[:, None] * a * dinv[None, :]
    h = a_hat @ (x @ params["w1"].T) + params["b1"]
    h = jnp.maximum(h, 0.0)
    h = jnp.maximum(h @ params["w2"].T + params["b2"], 0.0)
    h = jnp.maximum(h @ params["w3"].T + params["b3"], 0.0)
    return jax.nn.sigmoid(h @ params["w4"].T + params["b4"])


if __name__ == "__main__":
    key = jax.random.PRNGKey(0)
    k_x, k_p = jax.random.split(key)

    num_nodes = 8
    node_features = 4

    # Node feature matrix [N, F]
    x = jax.random.normal(k_x, (num_nodes, node_features), jnp.float32)

    # Small deterministic graph: bidirectional ring -> edge_index shape (2, 16)
    src = jnp.concatenate([
        jnp.arange(num_nodes, dtype=jnp.int32),
        (jnp.arange(num_nodes, dtype=jnp.int32) + 1) % num_nodes,
    ])
    dst = jnp.concatenate([
        (jnp.arange(num_nodes, dtype=jnp.int32) + 1) % num_nodes,
        jnp.arange(num_nodes, dtype=jnp.int32),
    ])
    edge_index = jnp.stack([src, dst], axis=0)

    params = init_params(k_p, node_features)

    out = gcn_homo_forward(x, edge_index, params)
    out = jax.block_until_ready(out)

    ref = reference_forward(x, edge_index, params)
    assert out.shape == (num_nodes, 1)
    # bf16 H (f32 accumulation, exact bf16 adjacency, f32 normalization).
    assert jnp.allclose(out, ref, atol=2e-2, rtol=2e-2), (out, ref)

    print("KERNEL_OK")
</pallas_src>

<mosaic_0001>
module attributes {stable_mosaic.version = 11 : i64} {
  func.func @kernel(%arg0: i32, %arg1: i32, %arg2: memref<128x128xbf16, #tpu.memory_space<vmem>>, %arg3: memref<128x4xbf16, #tpu.memory_space<vmem>>, %arg4: memref<128x1xf32, #tpu.memory_space<vmem>>, %arg5: memref<4x16xf32, #tpu.memory_space<vmem>>, %arg6: memref<1x16xf32, #tpu.memory_space<vmem>>, %arg7: memref<16x16xf32, #tpu.memory_space<vmem>>, %arg8: memref<1x16xf32, #tpu.memory_space<vmem>>, %arg9: memref<16x32xf32, #tpu.memory_space<vmem>>, %arg10: memref<1x32xf32, #tpu.memory_space<vmem>>, %arg11: memref<1x32xf32, #tpu.memory_space<vmem>>, %arg12: memref<1x1xf32, #tpu.memory_space<vmem>>, %arg13: memref<128x128xf32, #tpu.memory_space<vmem>>, %arg14: memref<128x4xf32, #tpu.memory_space<vmem>>) attributes {dimension_semantics = [#tpu.dimension_semantics<parallel>, #tpu.dimension_semantics<arbitrary>], iteration_bounds = array<i64: 1, 1>, scalar_prefetch = 0 : i64, scratch_operands = 1 : i64, tpu.core_type = #tpu.core_type<tc>, window_params = [{transform_indices = @transform_0, window_bounds = array<i64: 128, 128>}, {pipeline_mode = #tpu.pipeline_mode<synchronous>, transform_indices = @transform_1, window_bounds = array<i64: 128, 4>}, {transform_indices = @transform_2, window_bounds = array<i64: 128, 1>}, {pipeline_mode = #tpu.pipeline_mode<synchronous>, transform_indices = @transform_3, window_bounds = array<i64: 4, 16>}, {pipeline_mode = #tpu.pipeline_mode<synchronous>, transform_indices = @transform_4, window_bounds = array<i64: 1, 16>}, {pipeline_mode = #tpu.pipeline_mode<synchronous>, transform_indices = @transform_5, window_bounds = array<i64: 16, 16>}, {pipeline_mode = #tpu.pipeline_mode<synchronous>, transform_indices = @transform_6, window_bounds = array<i64: 1, 16>}, {pipeline_mode = #tpu.pipeline_mode<synchronous>, transform_indices = @transform_7, window_bounds = array<i64: 16, 32>}, {pipeline_mode = #tpu.pipeline_mode<synchronous>, transform_indices = @transform_8, window_bounds = array<i64: 1, 32>}, {pipeline_mode = #tpu.pipeline_mode<synchronous>, transform_indices = @transform_9, window_bounds = array<i64: 1, 32>}, {pipeline_mode = #tpu.pipeline_mode<synchronous>, transform_indices = @transform_10, window_bounds = array<i64: 1, 1>}, {transform_indices = @transform_11, window_bounds = array<i64: 128, 128>}]} {
    %c0_i32 = arith.constant 0 : i32
    %0 = arith.cmpi eq, %arg1, %c0_i32 : i32
    %1 = arith.extui %0 : i1 to i32
    %c0_i32_0 = arith.constant 0 : i32
    %2 = arith.cmpi ne, %1, %c0_i32_0 : i32
    scf.if %2 {
      %cst_9 = arith.constant 0.000000e+00 : f32
      %15 = vector.broadcast %cst_9 : f32 to vector<128x4xf32>
      %c0_10 = arith.constant 0 : index
      %c0_11 = arith.constant 0 : index
      %16 = vector.load %arg14[%c0_10, %c0_11] : memref<128x4xf32, #tpu.memory_space<vmem>>, vector<128x4xf32>
      tpu.vector_store %arg14[%c0_10, %c0_11], %15 {strides = array<i32>} : memref<128x4xf32, #tpu.memory_space<vmem>>, vector<128x4xf32>,
    } else {
    }
    %c128_i32 = arith.constant 128 : i32
    %3 = arith.muli %arg1, %c128_i32 : i32
    %4 = tpu.assume_multiple %3, 128 : i32
    %5 = arith.index_cast %4 : i32 to index
    %c0 = arith.constant 0 : index
    %6 = vector.load %arg3[%5, %c0] : memref<128x4xbf16, #tpu.memory_space<vmem>>, vector<128x4xbf16>
    %c0_1 = arith.constant 0 : index
    %c0_2 = arith.constant 0 : index
    %7 = vector.load %arg14[%c0_1, %c0_2] : memref<128x4xf32, #tpu.memory_space<vmem>>, vector<128x4xf32>
    %c0_3 = arith.constant 0 : index
    %c0_4 = arith.constant 0 : index
    %8 = vector.load %arg2[%c0_3, %c0_4] : memref<128x128xbf16, #tpu.memory_space<vmem>>, vector<128x128xbf16>
    %cst = arith.constant dense<0.000000e+00> : vector<128x4xf32>
    %9 = tpu.matmul %8, %6, %cst {dimension_numbers = #tpu.dot_dimension_numbers<[1], [0], [0], [1], [0, 0, 1, 1], [], []>} : vector<128x128xbf16>, vector<128x4xbf16>, vector<128x4xf32> -> vector<128x4xf32>
    %10 = arith.addf %7, %9 : vector<128x4xf32>
    %c0_5 = arith.constant 0 : index
    %c0_6 = arith.constant 0 : index
    %11 = vector.load %arg14[%c0_5, %c0_6] : memref<128x4xf32, #tpu.memory_space<vmem>>, vector<128x4xf32>
    tpu.vector_store %arg14[%c0_5, %c0_6], %10 {strides = array<i32>} : memref<128x4xf32, #tpu.memory_space<vmem>>, vector<128x4xf32>,
    %c0_i32_7 = arith.constant 0 : i32
    %12 = arith.cmpi eq, %arg1, %c0_i32_7 : i32
    %13 = arith.extui %12 : i1 to i32
    %c0_i32_8 = arith.constant 0 : i32
    %14 = arith.cmpi ne, %13, %c0_i32_8 : i32
    scf.if %14 {
      %c0_9 = arith.constant 0 : index
      %c0_10 = arith.constant 0 : index
      %15 = vector.load %arg14[%c0_9, %c0_10] : memref<128x4xf32, #tpu.memory_space<vmem>>, vector<128x4xf32>
      %c0_11 = arith.constant 0 : index
      %c0_12 = arith.constant 0 : index
      %16 = vector.load %arg4[%c0_11, %c0_12] : memref<128x1xf32, #tpu.memory_space<vmem>>, vector<128x1xf32>
      %17 = vector.broadcast %16 : vector<128x1xf32> to vector<128x4xf32>
      %18 = arith.mulf %15, %17 : vector<128x4xf32>
      %c0_13 = arith.constant 0 : index
      %c0_14 = arith.constant 0 : index
      %19 = vector.load %arg5[%c0_13, %c0_14] : memref<4x16xf32, #tpu.memory_space<vmem>>, vector<4x16xf32>
      %cst_15 = arith.constant dense<0.000000e+00> : vector<128x16xf32>
      %20 = tpu.matmul %18, %19, %cst_15 {dimension_numbers = #tpu.dot_dimension_numbers<[1], [0], [0], [1], [0, 0, 1, 1], [], []>} : vector<128x4xf32>, vector<4x16xf32>, vector<128x16xf32> -> vector<128x16xf32>
      %c0_16 = arith.constant 0 : index
      %c0_17 = arith.constant 0 : index
      %21 = vector.load %arg6[%c0_16, %c0_17] : memref<1x16xf32, #tpu.memory_space<vmem>>, vector<1x16xf32>
      %22 = vector.broadcast %21 : vector<1x16xf32> to vector<128x16xf32>
      %23 = arith.addf %20, %22 : vector<128x16xf32>
      %cst_18 = arith.constant 0.000000e+00 : f32
      %24 = vector.broadcast %cst_18 : f32 to vector<128x16xf32>
      %25 = arith.maximumf %23, %24 : vector<128x16xf32>
      %c0_19 = arith.constant 0 : index
      %c0_20 = arith.constant 0 : index
      %26 = vector.load %arg7[%c0_19, %c0_20] : memref<16x16xf32, #tpu.memory_space<vmem>>, vector<16x16xf32>
      %cst_21 = arith.constant dense<0.000000e+00> : vector<128x16xf32>
      %27 = tpu.matmul %25, %26, %cst_21 {dimension_numbers = #tpu.dot_dimension_numbers<[1], [0], [0], [1], [0, 0, 1, 1], [], []>} : vector<128x16xf32>, vector<16x16xf32>, vector<128x16xf32> -> vector<128x16xf32>
      %c0_22 = arith.constant 0 : index
      %c0_23 = arith.constant 0 : index
      %28 = vector.load %arg8[%c0_22, %c0_23] : memref<1x16xf32, #tpu.memory_space<vmem>>, vector<1x16xf32>
      %29 = vector.broadcast %28 : vector<1x16xf32> to vector<128x16xf32>
      %30 = arith.addf %27, %29 : vector<128x16xf32>
      %cst_24 = arith.constant 0.000000e+00 : f32
      %31 = vector.broadcast %cst_24 : f32 to vector<128x16xf32>
      %32 = arith.maximumf %30, %31 : vector<128x16xf32>
      %c0_25 = arith.constant 0 : index
      %c0_26 = arith.constant 0 : index
      %33 = vector.load %arg9[%c0_25, %c0_26] : memref<16x32xf32, #tpu.memory_space<vmem>>, vector<16x32xf32>
      %cst_27 = arith.constant dense<0.000000e+00> : vector<128x32xf32>
      %34 = tpu.matmul %32, %33, %cst_27 {dimension_numbers = #tpu.dot_dimension_numbers<[1], [0], [0], [1], [0, 0, 1, 1], [], []>} : vector<128x16xf32>, vector<16x32xf32>, vector<128x32xf32> -> vector<128x32xf32>
      %c0_28 = arith.constant 0 : index
      %c0_29 = arith.constant 0 : index
      %35 = vector.load %arg10[%c0_28, %c0_29] : memref<1x32xf32, #tpu.memory_space<vmem>>, vector<1x32xf32>
      %36 = vector.broadcast %35 : vector<1x32xf32> to vector<128x32xf32>
      %37 = arith.addf %34, %36 : vector<128x32xf32>
      %cst_30 = arith.constant 0.000000e+00 : f32
      %38 = vector.broadcast %cst_30 : f32 to vector<128x32xf32>
      %39 = arith.maximumf %37, %38 : vector<128x32xf32>
      %c0_31 = arith.constant 0 : index
      %c0_32 = arith.constant 0 : index
      %40 = vector.load %arg11[%c0_31, %c0_32] : memref<1x32xf32, #tpu.memory_space<vmem>>, vector<1x32xf32>
      %41 = vector.broadcast %40 : vector<1x32xf32> to vector<128x32xf32>
      %42 = arith.mulf %39, %41 : vector<128x32xf32>
      %cst_33 = arith.constant dense<0.000000e+00> : vector<128xf32>
      %43 = vector.multi_reduction <add>, %42, %cst_33 [1] : vector<128x32xf32> to vector<128xf32>
      %44 = vector.shape_cast %43 : vector<128xf32> to vector<128x1xf32>
      %c0_34 = arith.constant 0 : index
      %c0_35 = arith.constant 0 : index
      %45 = vector.load %arg12[%c0_34, %c0_35] : memref<1x1xf32, #tpu.memory_space<vmem>>, vector<1x1xf32>
      %46 = vector.broadcast %45 : vector<1x1xf32> to vector<128x1xf32>
      %47 = arith.addf %44, %46 : vector<128x1xf32>
      %48 = arith.negf %47 : vector<128x1xf32>
      %49 = math.exp %48 : vector<128x1xf32>
      %cst_36 = arith.constant 1.000000e+00 : f32
      %50 = vector.broadcast %cst_36 : f32 to vector<128x1xf32>
      %51 = arith.addf %50, %49 : vector<128x1xf32>
      %52 = arith.divf %50, %51 : vector<128x1xf32>
      %53 = vector.shape_cast %52 : vector<128x1xf32> to vector<128x1xf32>
      %54 = vector.broadcast %53 : vector<128x1xf32> to vector<128x128xf32>
      %c0_37 = arith.constant 0 : index
      %c0_38 = arith.constant 0 : index
      %55 = vector.load %arg13[%c0_37, %c0_38] : memref<128x128xf32, #tpu.memory_space<vmem>>, vector<128x128xf32>
      tpu.vector_store %arg13[%c0_37, %c0_38], %54 {strides = array<i32>} : memref<128x128xf32, #tpu.memory_space<vmem>>, vector<128x128xf32>,
    } else {
    }
    return
  }
  func.func @transform_0(%arg0: i32, %arg1: i32) -> (i32, i32) {
    %c0_i32 = arith.constant 0 : i32
    return %arg0, %arg1 : i32, i32
  }
  func.func @transform_1(%arg0: i32, %arg1: i32) -> (i32, i32) {
    %c0_i32 = arith.constant 0 : i32
    %c0_i32_0 = arith.constant 0 : i32
    %c0_i32_1 = arith.constant 0 : i32
    return %c0_i32, %c0_i32_0 : i32, i32
  }
  func.func @transform_2(%arg0: i32, %arg1: i32) -> (i32, i32) {
    %c0_i32 = arith.constant 0 : i32
    %c0_i32_0 = arith.constant 0 : i32
    return %arg0, %c0_i32 : i32, i32
  }
  func.func @transform_3(%arg0: i32, %arg1: i32) -> (i32, i32) {
    %c0_i32 = arith.constant 0 : i32
    %c0_i32_0 = arith.constant 0 : i32
    %c0_i32_1 = arith.constant 0 : i32
    return %c0_i32, %c0_i32_0 : i32, i32
  }
  func.func @transform_4(%arg0: i32, %arg1: i32) -> (i32, i32) {
    %c0_i32 = arith.constant 0 : i32
    %c0_i32_0 = arith.constant 0 : i32
    %c0_i32_1 = arith.constant 0 : i32
    return %c0_i32, %c0_i32_0 : i32, i32
  }
  func.func @transform_5(%arg0: i32, %arg1: i32) -> (i32, i32) {
    %c0_i32 = arith.constant 0 : i32
    %c0_i32_0 = arith.constant 0 : i32
    %c0_i32_1 = arith.constant 0 : i32
    return %c0_i32, %c0_i32_0 : i32, i32
  }
  func.func @transform_6(%arg0: i32, %arg1: i32) -> (i32, i32) {
    %c0_i32 = arith.constant 0 : i32
    %c0_i32_0 = arith.constant 0 : i32
    %c0_i32_1 = arith.constant 0 : i32
    return %c0_i32, %c0_i32_0 : i32, i32
  }
  func.func @transform_7(%arg0: i32, %arg1: i32) -> (i32, i32) {
    %c0_i32 = arith.constant 0 : i32
    %c0_i32_0 = arith.constant 0 : i32
    %c0_i32_1 = arith.constant 0 : i32
    return %c0_i32, %c0_i32_0 : i32, i32
  }
  func.func @transform_8(%arg0: i32, %arg1: i32) -> (i32, i32) {
    %c0_i32 = arith.constant 0 : i32
    %c0_i32_0 = arith.constant 0 : i32
    %c0_i32_1 = arith.constant 0 : i32
    return %c0_i32, %c0_i32_0 : i32, i32
  }
  func.func @transform_9(%arg0: i32, %arg1: i32) -> (i32, i32) {
    %c0_i32 = arith.constant 0 : i32
    %c0_i32_0 = arith.constant 0 : i32
    %c0_i32_1 = arith.constant 0 : i32
    return %c0_i32, %c0_i32_0 : i32, i32
  }
  func.func @transform_10(%arg0: i32, %arg1: i32) -> (i32, i32) {
    %c0_i32 = arith.constant 0 : i32
    %c0_i32_0 = arith.constant 0 : i32
    %c0_i32_1 = arith.constant 0 : i32
    return %c0_i32, %c0_i32_0 : i32, i32
  }
  func.func @transform_11(%arg0: i32, %arg1: i32) -> (i32, i32) {
    %c0_i32 = arith.constant 0 : i32
    %c0_i32_0 = arith.constant 0 : i32
    return %arg0, %c0_i32 : i32, i32
  }
}

</mosaic_0001>

<llo_original>
// kernel: tpu_custom_call.1
$region0: #{tpu_custom_call.1}
  #allocation0 [shape = 'u32[]', space=smem, size = 0x4, offset = 0x4, fixed_abs, tag = 'smem constant byte address 0x4 - core index']
  #allocation1 [shape = 'u32[144,128]{1,0:T(1,128)}', space=vmem, size = 0x12000, scoped, tag = 'internal scratch']
  #allocation2 [shape = 'f32[128,4]{1,0:T(8,128)}', space=vmem, size = 0x10000, scoped, tag = 'scratch operand']
  #allocation3 [shape = 'f32[1,1]{1,0:T(1,128)S(1)}', space=vmem, size = 0x200, scoped, tag = 'scoped memory for tpu_custom_call.1']
  %s0 = inlined_call_operand.vmem [shape: bf16[128,128], index: 0, kind: input, shape index: {}]
  %s1 = inlined_call_operand.vmem [shape: bf16[128,4], index: 1, kind: input, shape index: {}]
  %s2 = inlined_call_operand.vmem [shape: f32[128,1], index: 2, kind: input, shape index: {}]
  %s3 = inlined_call_operand.vmem [shape: f32[4,16], index: 3, kind: input, shape index: {}]
  %s4 = inlined_call_operand.vmem [shape: f32[1,16], index: 4, kind: input, shape index: {}]
  %s5 = inlined_call_operand.vmem [shape: f32[16,16], index: 5, kind: input, shape index: {}]
  %s6 = inlined_call_operand.vmem [shape: f32[1,16], index: 6, kind: input, shape index: {}]
  %s7 = inlined_call_operand.vmem [shape: f32[16,32], index: 7, kind: input, shape index: {}]
  %s8 = inlined_call_operand.vmem [shape: f32[1,32], index: 8, kind: input, shape index: {}]
  %s9 = inlined_call_operand.vmem [shape: f32[1,32], index: 9, kind: input, shape index: {}]
  %s10 = inlined_call_operand.<no memory space> [shape: f32[1,1], index: 10, kind: input, shape index: {}]
  %s11 = inlined_call_operand.hbm [shape: f32[128,128], index: 11, kind: output, shape index: {}]
  %s12 = sld [smem:[#allocation0]]
  $region62: #{tpu_custom_call.1} parent=0
    _
  %s14 = ssub.s32 1, %s12
  %s15 = scalar_select 0, %s14, %s12
  %v16 = vstv %s10
  %17 = vst [vmem:[#allocation3] sm:$0x1] %v16
  $region1: #{tpu_custom_call.1} parent=0
    #allocation4 [shape = 'u8[65536]{0}', space=vmem, size = 0x10000, scoped, tag = 'output window, operand 0, single buffered']
    #allocation5 [shape = 's32[1]{0}', space=sflag, size = 0x4, scoped, tag = 'scoped memory for tpu_custom_call.1']
    %18 = vsyncpa [#allocation5], 0
    // Predicated region
    $region2: #{tpu_custom_call.1} parent=1 // pred_check
      _
    $region3: #{tpu_custom_call.1} parent=1 // pred_check_branch
      %20 = sbr.rel (0) target = $region5
    $region4: #{tpu_custom_call.1} parent=1 // pred_region
      _
    $region5: #{tpu_custom_call.1} parent=1 // pred_fallthru
      _
    // Predicated region
    $region6: #{tpu_custom_call.1} parent=1 // pred_check
      _
    $region7: #{tpu_custom_call.1} parent=1 // pred_check_branch
      %22 = sbr.rel (0) target = $region9
    $region8: #{tpu_custom_call.1} parent=1 // pred_region
      _
    $region9: #{tpu_custom_call.1} parent=1 // pred_fallthru
      _
    // Predicated region
    $region10: #{tpu_custom_call.1} parent=1 // pred_check
      _
    $region11: #{tpu_custom_call.1} parent=1 // pred_check_branch
      %24 = sbr.rel (0) target = $region13
    $region12: #{tpu_custom_call.1} parent=1 // pred_region
      _
    $region13: #{tpu_custom_call.1} parent=1 // pred_fallthru
      _
    // Predicated region
    $region14: #{tpu_custom_call.1} parent=1 // pred_check
      _
    $region15: #{tpu_custom_call.1} parent=1 // pred_check_branch
      %26 = sbr.rel (0) target = $region17
    $region16: #{tpu_custom_call.1} parent=1 // pred_region
      _
    $region17: #{tpu_custom_call.1} parent=1 // pred_fallthru
      _
    // Predicated region
    $region18: #{tpu_custom_call.1} parent=1 // pred_check
      _
    $region19: #{tpu_custom_call.1} parent=1 // pred_check_branch
      %28 = sbr.rel (0) target = $region21
    $region20: #{tpu_custom_call.1} parent=1 // pred_region
      _
    $region21: #{tpu_custom_call.1} parent=1 // pred_fallthru
      _
    // Predicated region
    $region22: #{tpu_custom_call.1} parent=1 // pred_check
      _
    $region23: #{tpu_custom_call.1} parent=1 // pred_check_branch
      %30 = sbr.rel (0) target = $region25
    $region24: #{tpu_custom_call.1} parent=1 // pred_region
      _
    $region25: #{tpu_custom_call.1} parent=1 // pred_fallthru
      _
    // Predicated region
    $region26: #{tpu_custom_call.1} parent=1 // pred_check
      _
    $region27: #{tpu_custom_call.1} parent=1 // pred_check_branch
      %32 = sbr.rel (0) target = $region29
    $region28: #{tpu_custom_call.1} parent=1 // pred_region
      _
    $region29: #{tpu_custom_call.1} parent=1 // pred_fallthru
      _
    // Predicated region
    $region30: #{tpu_custom_call.1} parent=1 // pred_check
      _
    $region31: #{tpu_custom_call.1} parent=1 // pred_check_branch
      %34 = sbr.rel (0) target = $region33
    $region32: #{tpu_custom_call.1} parent=1 // pred_region
      _
    $region33: #{tpu_custom_call.1} parent=1 // pred_fallthru
      _
    // Predicated region
    $region34: #{tpu_custom_call.1} parent=1 // pred_check
      _
    $region35: #{tpu_custom_call.1} parent=1 // pred_check_branch
      %36 = sbr.rel (0) target = $region37
    $region36: #{tpu_custom_call.1} parent=1 // pred_region
      _
    $region37: #{tpu_custom_call.1} parent=1 // pred_fallthru
      _
    // Predicated region
    $region38: #{tpu_custom_call.1} parent=1 // pred_check
      _
    $region39: #{tpu_custom_call.1} parent=1 // pred_check_branch
      %38 = sbr.rel (0) target = $region41
    $region40: #{tpu_custom_call.1} parent=1 // pred_region
      _
    $region41: #{tpu_custom_call.1} parent=1 // pred_fallthru
      _
    // Predicated region
    $region42: #{tpu_custom_call.1} parent=1 // pred_check
      _
    $region43: #{tpu_custom_call.1} parent=1 // pred_check_branch
      %40 = sbr.rel (0) target = $region45
    $region44: #{tpu_custom_call.1} parent=1 // pred_region
      _
    $region45: #{tpu_custom_call.1} parent=1 // pred_fallthru
      _
    %p42 = scmp.eq.s32.totalorder 0, 0
    // Predicated region
    $region46: #{tpu_custom_call.1} parent=1 // pred_check
      %p43 = pneg %p42
    $region47: #{tpu_custom_call.1} parent=1 // pred_check_branch
      %45 = sbr.rel (%p43) target = $region49
    $region48: #{tpu_custom_call.1} parent=1 // pred_region
      %vm46 = vcmask 31744
      %47 = vst.msk [vmem:[#allocation2] sm:$0xff] %vm46, 0.0
      %48 = vst.msk [vmem:[#allocation2 + $0x8] sm:$0xff] %vm46, 0.0
      %49 = vst.msk [vmem:[#allocation2 + $0x10] sm:$0xff] %vm46, 0.0
      %50 = vst.msk [vmem:[#allocation2 + $0x18] sm:$0xff] %vm46, 0.0
      %51 = vst.msk [vmem:[#allocation2 + $0x20] sm:$0xff] %vm46, 0.0
      %52 = vst.msk [vmem:[#allocation2 + $0x28] sm:$0xff] %vm46, 0.0
      %53 = vst.msk [vmem:[#allocation2 + $0x30] sm:$0xff] %vm46, 0.0
      %54 = vst.msk [vmem:[#allocation2 + $0x38] sm:$0xff] %vm46, 0.0
      %55 = vst.msk [vmem:[#allocation2 + $0x40] sm:$0xff] %vm46, 0.0
      %56 = vst.msk [vmem:[#allocation2 + $0x48] sm:$0xff] %vm46, 0.0
      %57 = vst.msk [vmem:[#allocation2 + $0x50] sm:$0xff] %vm46, 0.0
      %58 = vst.msk [vmem:[#allocation2 + $0x58] sm:$0xff] %vm46, 0.0
      %59 = vst.msk [vmem:[#allocation2 + $0x60] sm:$0xff] %vm46, 0.0
      %60 = vst.msk [vmem:[#allocation2 + $0x68] sm:$0xff] %vm46, 0.0
      %61 = vst.msk [vmem:[#allocation2 + $0x70] sm:$0xff] %vm46, 0.0
      %62 = vst.msk [vmem:[#allocation2 + $0x78] sm:$0xff] %vm46, 0.0
    $region49: #{tpu_custom_call.1} parent=1 // pred_fallthru
      _
    %s63 = smul.u32 0, 128
    %s64 = sshra.s32 %s63, 3
    %s65 = sand.u32 %s63, 7
    %s66 = smul.addr %s64, 4
    %s67 = scalar_lea.vmem %s1, %s66
    %v68 = vld [vmem:[%s67] sm:$0xf]
    %v69 = vld [vmem:[%s67 + $0x4] sm:$0xf]
    %v70 = vld [vmem:[%s67 + $0x8] sm:$0xf]
    %v71 = vld [vmem:[%s67 + $0xc] sm:$0xf]
    %v72 = vld [vmem:[%s67 + $0x10] sm:$0xf]
    %v73 = vld [vmem:[%s67 + $0x14] sm:$0xf]
    %v74 = vld [vmem:[%s67 + $0x18] sm:$0xf]
    %v75 = vld [vmem:[%s67 + $0x1c] sm:$0xf]
    %v76 = vld [vmem:[%s67 + $0x20] sm:$0xf]
    %v77 = vld [vmem:[%s67 + $0x24] sm:$0xf]
    %v78 = vld [vmem:[%s67 + $0x28] sm:$0xf]
    %v79 = vld [vmem:[%s67 + $0x2c] sm:$0xf]
    %v80 = vld [vmem:[%s67 + $0x30] sm:$0xf]
    %v81 = vld [vmem:[%s67 + $0x34] sm:$0xf]
    %v82 = vld [vmem:[%s67 + $0x38] sm:$0xf]
    %v83 = vld [vmem:[%s67 + $0x3c] sm:$0xf]
    %v84 = vld [vmem:[#allocation2] sm:$0xff]
    %v85 = vld [vmem:[#allocation2 + $0x8] sm:$0xff]
    %v86 = vld [vmem:[#allocation2 + $0x10] sm:$0xff]
    %v87 = vld [vmem:[#allocation2 + $0x18] sm:$0xff]
    %v88 = vld [vmem:[#allocation2 + $0x20] sm:$0xff]
    %v89 = vld [vmem:[#allocation2 + $0x28] sm:$0xff]
    %v90 = vld [vmem:[#allocation2 + $0x30] sm:$0xff]
    %v91 = vld [vmem:[#allocation2 + $0x38] sm:$0xff]
    %v92 = vld [vmem:[#allocation2 + $0x40] sm:$0xff]
    %v93 = vld [vmem:[#allocation2 + $0x48] sm:$0xff]
    %v94 = vld [vmem:[#allocation2 + $0x50] sm:$0xff]
    %v95 = vld [vmem:[#allocation2 + $0x58] sm:$0xff]
    %v96 = vld [vmem:[#allocation2 + $0x60] sm:$0xff]
    %v97 = vld [vmem:[#allocation2 + $0x68] sm:$0xff]
    %v98 = vld [vmem:[#allocation2 + $0x70] sm:$0xff]
    %v99 = vld [vmem:[#allocation2 + $0x78] sm:$0xff]
    %v100 = vld [vmem:[%s0] sm:$0xf]
    %v101 = vld [vmem:[%s0 + $0x4] sm:$0xf]
    %v102 = vld [vmem:[%s0 + $0x8] sm:$0xf]
    %v103 = vld [vmem:[%s0 + $0xc] sm:$0xf]
    %v104 = vld [vmem:[%s0 + $0x10] sm:$0xf]
    %v105 = vld [vmem:[%s0 + $0x14] sm:$0xf]
    %v106 = vld [vmem:[%s0 + $0x18] sm:$0xf]
    %v107 = vld [vmem:[%s0 + $0x1c] sm:$0xf]
    %v108 = vld [vmem:[%s0 + $0x20] sm:$0xf]
    %v109 = vld [vmem:[%s0 + $0x24] sm:$0xf]
    %v110 = vld [vmem:[%s0 + $0x28] sm:$0xf]
    %v111 = vld [vmem:[%s0 + $0x2c] sm:$0xf]
    %v112 = vld [vmem:[%s0 + $0x30] sm:$0xf]
    %v113 = vld [vmem:[%s0 + $0x34] sm:$0xf]
    %v114 = vld [vmem:[%s0 + $0x38] sm:$0xf]
    %v115 = vld [vmem:[%s0 + $0x3c] sm:$0xf]
    %v132 = vunpack.c.l.b16 %v100
    %v133 = vunpack.c.l.b16 %v101
    %v134 = vunpack.c.l.b16 %v102
    %v135 = vunpack.c.l.b16 %v103
    %v136 = vunpack.c.l.b16 %v104
    %v137 = vunpack.c.l.b16 %v105
    %v138 = vunpack.c.l.b16 %v106
    %v139 = vunpack.c.l.b16 %v107
    %v140 = vunpack.c.l.b16 %v108
    %v141 = vunpack.c.l.b16 %v109
    %v142 = vunpack.c.l.b16 %v110
    %v143 = vunpack.c.l.b16 %v111
    %v144 = vunpack.c.l.b16 %v112
    %v145 = vunpack.c.l.b16 %v113
    %v146 = vunpack.c.l.b16 %v114
    %v147 = vunpack.c.l.b16 %v115
    %v148 = vpack.c.b16 %v133, %v132
    %v149 = vpack.c.b16 %v135, %v134
    %v150 = vpack.c.b16 %v137, %v136
    %v151 = vpack.c.b16 %v139, %v138
    %v152 = vpack.c.b16 %v141, %v140
    %v153 = vpack.c.b16 %v143, %v142
    %v154 = vpack.c.b16 %v145, %v144
    %v155 = vpack.c.b16 %v147, %v146
    %v180 = vunpack.c.l.b16 %v68
    %v181 = vunpack.c.l.b16 %v69
    %v182 = vunpack.c.l.b16 %v70
    %v183 = vunpack.c.l.b16 %v71
    %v184 = vunpack.c.l.b16 %v72
    %v185 = vunpack.c.l.b16 %v73
    %v186 = vunpack.c.l.b16 %v74
    %v187 = vunpack.c.l.b16 %v75
    %v188 = vunpack.c.l.b16 %v76
    %v189 = vunpack.c.l.b16 %v77
    %v190 = vunpack.c.l.b16 %v78
    %v191 = vunpack.c.l.b16 %v79
    %v192 = vunpack.c.l.b16 %v80
    %v193 = vunpack.c.l.b16 %v81
    %v194 = vunpack.c.l.b16 %v82
    %v195 = vunpack.c.l.b16 %v83
    %v196 = vpack.c.b16 %v181, %v180
    %v197 = vpack.c.b16 %v183, %v182
    %v198 = vpack.c.b16 %v185, %v184
    %v199 = vpack.c.b16 %v187, %v186
    %v200 = vpack.c.b16 %v189, %v188
    %v201 = vpack.c.b16 %v191, %v190
    %v202 = vpack.c.b16 %v193, %v192
    %v203 = vpack.c.b16 %v195, %v194
    %212 = vmatprep.subr.bf16.mxu0 0
    %213 = vmatpush1.bf16.msra.mxu0 %v203
    %214 = vmatprep.subr.bf16.mxu0 0
    %215 = vmatpush1.bf16.msra.mxu0 %v202
    %216 = vmatprep.subr.bf16.mxu0 0
    %217 = vmatpush1.bf16.msra.mxu0 %v201
    %218 = vmatprep.subr.bf16.mxu0 0
    %219 = vmatpush1.bf16.msra.mxu0 %v200
    %220 = vmatprep.subr.bf16.mxu0 0
    %221 = vmatpush1.bf16.msra.mxu0 %v199
    %222 = vmatprep.subr.bf16.mxu0 0
    %223 = vmatpush1.bf16.msra.mxu0 %v198
    %224 = vmatprep.subr.bf16.mxu0 0
    %225 = vmatpush1.bf16.msra.mxu0 %v197
    %226 = vmatprep.subr.bf16.mxu0 0
    %227 = vmatpush1.bf16.msra.mxu0 %v196
    %228 = vmatprep.subr.bf16.mxu0 0
    %229 = vmatpush2.bf16.msra.mxu0 0
    %230 = vmatprep.subr.bf16.mxu0 0
    %231 = vmatpush2.bf16.msra.mxu0 0
    %232 = vmatprep.subr.bf16.mxu0 0
    %233 = vmatpush2.bf16.msra.mxu0 0
    %234 = vmatprep.subr.bf16.mxu0 0
    %235 = vmatpush2.bf16.msra.mxu0 0
    %236 = vmatprep.subr.bf16.mxu0 0
    %237 = vmatpush2.bf16.msra.mxu0 0
    %238 = vmatprep.subr.bf16.mxu0 0
    %239 = vmatpush2.bf16.msra.mxu0 0
    %240 = vmatprep.subr.bf16.mxu0 0
    %241 = vmatpush2.bf16.msra.mxu0 0
    %242 = vmatprep.subr.bf16.mxu0 0
    %243 = vmatpush2.bf16.msra.mxu0 0
    %244 = vmatprep.mubr.bf16.mxu0 0
    %245 = vmatmul.mubr.bf16.gmra.mxu0 %v148
    %v246 = vpop.f32.mrf.mxu0
    %v247 = vadd.f32 0.0, %v246
    %v248 = vpop.f32.mrf.mxu0
    %v249 = vpop.f32.mrf.mxu0
    %v250 = vadd.f32 0.0, %v249
    %v251 = vpop.f32.mrf.mxu0
    %252 = vmatprep.mubr.bf16.mxu0 0
    %253 = vmatmul.mubr.bf16.gmra.mxu0 %v149
    %v254 = vpop.f32.mrf.mxu0
    %v255 = vadd.f32 0.0, %v254
    %v256 = vpop.f32.mrf.mxu0
    %v257 = vpop.f32.mrf.mxu0
    %v258 = vadd.f32 0.0, %v257
    %v259 = vpop.f32.mrf.mxu0
    %260 = vmatprep.mubr.bf16.mxu0 0
    %261 = vmatmul.mubr.bf16.gmra.mxu0 %v150
    %v262 = vpop.f32.mrf.mxu0
    %v263 = vadd.f32 0.0, %v262
    %v264 = vpop.f32.mrf.mxu0
    %v265 = vpop.f32.mrf.mxu0
    %v266 = vadd.f32 0.0, %v265
    %v267 = vpop.f32.mrf.mxu0
    %268 = vmatprep.mubr.bf16.mxu0 0
    %269 = vmatmul.mubr.bf16.gmra.mxu0 %v151
    %v270 = vpop.f32.mrf.mxu0
    %v271 = vadd.f32 0.0, %v270
    %v272 = vpop.f32.mrf.mxu0
    %v273 = vpop.f32.mrf.mxu0
    %v274 = vadd.f32 0.0, %v273
    %v275 = vpop.f32.mrf.mxu0
    %276 = vmatprep.mubr.bf16.mxu0 0
    %277 = vmatmul.mubr.bf16.gmra.mxu0 %v152
    %v278 = vpop.f32.mrf.mxu0
    %v279 = vadd.f32 0.0, %v278
    %v280 = vpop.f32.mrf.mxu0
    %v281 = vpop.f32.mrf.mxu0
    %v282 = vadd.f32 0.0, %v281
    %v283 = vpop.f32.mrf.mxu0
    %284 = vmatprep.mubr.bf16.mxu0 0
    %285 = vmatmul.mubr.bf16.gmra.mxu0 %v153
    %v286 = vpop.f32.mrf.mxu0
    %v287 = vadd.f32 0.0, %v286
    %v288 = vpop.f32.mrf.mxu0
    %v289 = vpop.f32.mrf.mxu0
    %v290 = vadd.f32 0.0, %v289
    %v291 = vpop.f32.mrf.mxu0
    %292 = vmatprep.mubr.bf16.mxu0 0
    %293 = vmatmul.mubr.bf16.gmra.mxu0 %v154
    %v294 = vpop.f32.mrf.mxu0
    %v295 = vadd.f32 0.0, %v294
    %v296 = vpop.f32.mrf.mxu0
    %v297 = vpop.f32.mrf.mxu0
    %v298 = vadd.f32 0.0, %v297
    %v299 = vpop.f32.mrf.mxu0
    %300 = vmatprep.mubr.bf16.mxu0 0
    %301 = vmatmul.mubr.bf16.gmra.mxu0 %v155
    %v302 = vpop.f32.mrf.mxu0
    %v303 = vadd.f32 0.0, %v302
    %v304 = vpop.f32.mrf.mxu0
    %v305 = vpop.f32.mrf.mxu0
    %v306 = vadd.f32 0.0, %v305
    %v307 = vpop.f32.mrf.mxu0
    %308 = vdwg.mxu0
    %v309 = vadd.f32 %v84, %v247
    %v310 = vadd.f32 %v85, %v250
    %v311 = vadd.f32 %v86, %v255
    %v312 = vadd.f32 %v87, %v258
    %v313 = vadd.f32 %v88, %v263
    %v314 = vadd.f32 %v89, %v266
    %v315 = vadd.f32 %v90, %v271
    %v316 = vadd.f32 %v91, %v274
    %v317 = vadd.f32 %v92, %v279
    %v318 = vadd.f32 %v93, %v282
    %v319 = vadd.f32 %v94, %v287
    %v320 = vadd.f32 %v95, %v290
    %v321 = vadd.f32 %v96, %v295
    %v322 = vadd.f32 %v97, %v298
    %v323 = vadd.f32 %v98, %v303
    %v324 = vadd.f32 %v99, %v306
    %vm325 = vcmask 31744
    %326 = vst.msk [vmem:[#allocation2] sm:$0xff] %vm325, %v309
    %327 = vst.msk [vmem:[#allocation2 + $0x8] sm:$0xff] %vm325, %v310
    %328 = vst.msk [vmem:[#allocation2 + $0x10] sm:$0xff] %vm325, %v311
    %329 = vst.msk [vmem:[#allocation2 + $0x18] sm:$0xff] %vm325, %v312
    %330 = vst.msk [vmem:[#allocation2 + $0x20] sm:$0xff] %vm325, %v313
    %331 = vst.msk [vmem:[#allocation2 + $0x28] sm:$0xff] %vm325, %v314
    %332 = vst.msk [vmem:[#allocation2 + $0x30] sm:$0xff] %vm325, %v315
    %333 = vst.msk [vmem:[#allocation2 + $0x38] sm:$0xff] %vm325, %v316
    %334 = vst.msk [vmem:[#allocation2 + $0x40] sm:$0xff] %vm325, %v317
    %335 = vst.msk [vmem:[#allocation2 + $0x48] sm:$0xff] %vm325, %v318
    %336 = vst.msk [vmem:[#allocation2 + $0x50] sm:$0xff] %vm325, %v319
    %337 = vst.msk [vmem:[#allocation2 + $0x58] sm:$0xff] %vm325, %v320
    %338 = vst.msk [vmem:[#allocation2 + $0x60] sm:$0xff] %vm325, %v321
    %339 = vst.msk [vmem:[#allocation2 + $0x68] sm:$0xff] %vm325, %v322
    %340 = vst.msk [vmem:[#allocation2 + $0x70] sm:$0xff] %vm325, %v323
    %341 = vst.msk [vmem:[#allocation2 + $0x78] sm:$0xff] %vm325, %v324
    // Predicated region
    $region50: #{tpu_custom_call.1} parent=1 // pred_check
      %p342 = pneg %p42
    $region51: #{tpu_custom_call.1} parent=1 // pred_check_branch
      %344 = sbr.rel (%p342) target = $region53
    $region52: #{tpu_custom_call.1} parent=1 // pred_region
      %v345 = vld [vmem:[#allocation2] sm:$0xff]
      %v346 = vld [vmem:[#allocation2 + $0x8] sm:$0xff]
      %v347 = vld [vmem:[#allocation2 + $0x10] sm:$0xff]
      %v348 = vld [vmem:[#allocation2 + $0x18] sm:$0xff]
      %v349 = vld [vmem:[#allocation2 + $0x20] sm:$0xff]
      %v350 = vld [vmem:[#allocation2 + $0x28] sm:$0xff]
      %v351 = vld [vmem:[#allocation2 + $0x30] sm:$0xff]
      %v352 = vld [vmem:[#allocation2 + $0x38] sm:$0xff]
      %v353 = vld [vmem:[#allocation2 + $0x40] sm:$0xff]
      %v354 = vld [vmem:[#allocation2 + $0x48] sm:$0xff]
      %v355 = vld [vmem:[#allocation2 + $0x50] sm:$0xff]
      %v356 = vld [vmem:[#allocation2 + $0x58] sm:$0xff]
      %v357 = vld [vmem:[#allocation2 + $0x60] sm:$0xff]
      %v358 = vld [vmem:[#allocation2 + $0x68] sm:$0xff]
      %v359 = vld [vmem:[#allocation2 + $0x70] sm:$0xff]
      %v360 = vld [vmem:[#allocation2 + $0x78] sm:$0xff]
      %v361 = vld [vmem:[%s2] sm:$0xff]
      %v362 = vld [vmem:[%s2 + $0x8] sm:$0xff]
      %v363 = vld [vmem:[%s2 + $0x10] sm:$0xff]
      %v364 = vld [vmem:[%s2 + $0x18] sm:$0xff]
      %v365 = vld [vmem:[%s2 + $0x20] sm:$0xff]
      %v366 = vld [vmem:[%s2 + $0x28] sm:$0xff]
      %v367 = vld [vmem:[%s2 + $0x30] sm:$0xff]
      %v368 = vld [vmem:[%s2 + $0x38] sm:$0xff]
      %v369 = vld [vmem:[%s2 + $0x40] sm:$0xff]
      %v370 = vld [vmem:[%s2 + $0x48] sm:$0xff]
      %v371 = vld [vmem:[%s2 + $0x50] sm:$0xff]
      %v372 = vld [vmem:[%s2 + $0x58] sm:$0xff]
      %v373 = vld [vmem:[%s2 + $0x60] sm:$0xff]
      %v374 = vld [vmem:[%s2 + $0x68] sm:$0xff]
      %v375 = vld [vmem:[%s2 + $0x70] sm:$0xff]
      %v376 = vld [vmem:[%s2 + $0x78] sm:$0xff]
      %378 = vset.pattern.permute.xlu0 0
      %379 = vperm.xlu0 %378, %v361
      %v380 = vpop.permute.xlu0 %379
      %383 = vset.pattern.permute.xlu0 0
      %384 = vperm.xlu0 %383, %v362
      %v385 = vpop.permute.xlu0 %384
      %388 = vset.pattern.permute.xlu0 0
      %389 = vperm.xlu0 %388, %v363
      %v390 = vpop.permute.xlu0 %389
      %393 = vset.pattern.permute.xlu0 0
      %394 = vperm.xlu0 %393, %v364
      %v395 = vpop.permute.xlu0 %394
      %398 = vset.pattern.permute.xlu0 0
      %399 = vperm.xlu0 %398, %v365
      %v400 = vpop.permute.xlu0 %399
      %403 = vset.pattern.permute.xlu0 0
      %404 = vperm.xlu0 %403, %v366
      %v405 = vpop.permute.xlu0 %404
      %408 = vset.pattern.permute.xlu0 0
      %409 = vperm.xlu0 %408, %v367
      %v410 = vpop.permute.xlu0 %409
      %413 = vset.pattern.permute.xlu0 0
      %414 = vperm.xlu0 %413, %v368
      %v415 = vpop.permute.xlu0 %414
      %418 = vset.pattern.permute.xlu0 0
      %419 = vperm.xlu0 %418, %v369
      %v420 = vpop.permute.xlu0 %419
      %423 = vset.pattern.permute.xlu0 0
      %424 = vperm.xlu0 %423, %v370
      %v425 = vpop.permute.xlu0 %424
      %428 = vset.pattern.permute.xlu0 0
      %429 = vperm.xlu0 %428, %v371
      %v430 = vpop.permute.xlu0 %429
      %433 = vset.pattern.permute.xlu0 0
      %434 = vperm.xlu0 %433, %v372
      %v435 = vpop.permute.xlu0 %434
      %438 = vset.pattern.permute.xlu0 0
      %439 = vperm.xlu0 %438, %v373
      %v440 = vpop.permute.xlu0 %439
      %443 = vset.pattern.permute.xlu0 0
      %444 = vperm.xlu0 %443, %v374
      %v445 = vpop.permute.xlu0 %444
      %448 = vset.pattern.permute.xlu0 0
      %449 = vperm.xlu0 %448, %v375
      %v450 = vpop.permute.xlu0 %449
      %453 = vset.pattern.permute.xlu0 0
      %454 = vperm.xlu0 %453, %v376
      %v455 = vpop.permute.xlu0 %454
      %v457 = vmul.f32 %v345, %v380
      %v458 = vmul.f32 %v346, %v385
      %v459 = vmul.f32 %v347, %v390
      %v460 = vmul.f32 %v348, %v395
      %v461 = vmul.f32 %v349, %v400
      %v462 = vmul.f32 %v350, %v405
      %v463 = vmul.f32 %v351, %v410
      %v464 = vmul.f32 %v352, %v415
      %v465 = vmul.f32 %v353, %v420
      %v466 = vmul.f32 %v354, %v425
      %v467 = vmul.f32 %v355, %v430
      %v468 = vmul.f32 %v356, %v435
      %v469 = vmul.f32 %v357, %v440
      %v470 = vmul.f32 %v358, %v445
      %v471 = vmul.f32 %v359, %v450
      %v472 = vmul.f32 %v360, %v455
      %v473 = vld [vmem:[%s3] sm:$0xf]
      %v474 = vld [vmem:[%s4] sm:$0x1]
      %v476 = vlaneseq
      %v477 = vshrl.u32 %v476, 7
      %v478 = vsub.s32 0, %v477
      %v479 = vrot.slane %v474, %v478
      %v482 = vsel %vm325, %v457, 0
      %v485 = vsel %vm325, %v458, 0
      %v488 = vsel %vm325, %v459, 0
      %v491 = vsel %vm325, %v460, 0
      %v494 = vsel %vm325, %v461, 0
      %v497 = vsel %vm325, %v462, 0
      %v500 = vsel %vm325, %v463, 0
      %v503 = vsel %vm325, %v464, 0
      %v506 = vsel %vm325, %v465, 0
      %v509 = vsel %vm325, %v466, 0
      %v512 = vsel %vm325, %v467, 0
      %v515 = vsel %vm325, %v468, 0
      %v518 = vsel %vm325, %v469, 0
      %v521 = vsel %vm325, %v470, 0
      %v524 = vsel %vm325, %v471, 0
      %v527 = vsel %vm325, %v472, 0
      %vm529 = vcmask 1043456
      %v531 = vsel %vm529, %v473, 0
      %533 = vmatprep.subr.mxu0 0.0
      %534 = vmatpush1.msra.mxu0 0.0
      %535 = vmatprep.subr.mxu0 0.0
      %536 = vmatpush1.msra.mxu0 0.0
      %537 = vmatprep.subr.mxu0 0.0
      %538 = vmatpush1.msra.mxu0 0.0
      %539 = vmatprep.subr.mxu0 0.0
      %540 = vmatpush1.msra.mxu0 0.0
      %541 = vmatprep.subr.mxu0 0.0
      %542 = vmatpush1.msra.mxu0 0.0
      %543 = vmatprep.subr.mxu0 0.0
      %544 = vmatpush1.msra.mxu0 0.0
      %545 = vmatprep.subr.mxu0 0.0
      %546 = vmatpush1.msra.mxu0 0.0
      %547 = vmatprep.subr.mxu0 0.0
      %548 = vmatpush1.msra.mxu0 0.0
      %549 = vmatprep.subr.mxu0 0.0
      %550 = vmatpush1.msra.mxu0 0.0
      %551 = vmatprep.subr.mxu0 0.0
      %552 = vmatpush1.msra.mxu0 0.0
      %553 = vmatprep.subr.mxu0 0.0
      %554 = vmatpush1.msra.mxu0 0.0
      %555 = vmatprep.subr.mxu0 0.0
      %556 = vmatpush1.msra.mxu0 0.0
      %557 = vmatprep.subr.mxu0 0.0
      %558 = vmatpush1.msra.mxu0 0.0
      %559 = vmatprep.subr.mxu0 0.0
      %560 = vmatpush1.msra.mxu0 0.0
      %561 = vmatprep.subr.mxu0 0.0
      %562 = vmatpush1.msra.mxu0 0.0
      %563 = vmatprep.subr.mxu0 0.0
      %564 = vmatpush1.msra.mxu0 %v531
      %565 = vmatprep.subr.mxu0 0.0
      %566 = vmatpush2.msra.mxu0 0.0
      %567 = vmatprep.subr.mxu0 0.0
      %568 = vmatpush2.msra.mxu0 0.0
      %569 = vmatprep.subr.mxu0 0.0
      %570 = vmatpush2.msra.mxu0 0.0
      %571 = vmatprep.subr.mxu0 0.0
      %572 = vmatpush2.msra.mxu0 0.0
      %573 = vmatprep.subr.mxu0 0.0
      %574 = vmatpush2.msra.mxu0 0.0
      %575 = vmatprep.subr.mxu0 0.0
      %576 = vmatpush2.msra.mxu0 0.0
      %577 = vmatprep.subr.mxu0 0.0
      %578 = vmatpush2.msra.mxu0 0.0
      %579 = vmatprep.subr.mxu0 0.0
      %580 = vmatpush2.msra.mxu0 0.0
      %581 = vmatprep.subr.mxu0 0.0
      %582 = vmatpush2.msra.mxu0 0.0
      %583 = vmatprep.subr.mxu0 0.0
      %584 = vmatpush2.msra.mxu0 0.0
      %585 = vmatprep.subr.mxu0 0.0
      %586 = vmatpush2.msra.mxu0 0.0
      %587 = vmatprep.subr.mxu0 0.0
      %588 = vmatpush2.msra.mxu0 0.0
      %589 = vmatprep.subr.mxu0 0.0
      %590 = vmatpush2.msra.mxu0 0.0
      %591 = vmatprep.subr.mxu0 0.0
      %592 = vmatpush2.msra.mxu0 0.0
      %593 = vmatprep.subr.mxu0 0.0
      %594 = vmatpush2.msra.mxu0 0.0
      %595 = vmatprep.subr.mxu0 0.0
      %596 = vmatpush2.msra.mxu0 0.0
      %597 = vmatprep.mubr.f32.mxu0 0.0
      %598 = vmatmul.mubr.f32.gmra.mxu0 %v482
      %v599 = vpop.f32.mrf.mxu0
      %v600 = vadd.f32 %v479, %v599
      %v601 = vpop.f32.mrf.mxu0
      %602 = vmatprep.mubr.f32.mxu0 0.0
      %603 = vmatmul.mubr.f32.gmra.mxu0 %v485
      %v604 = vpop.f32.mrf.mxu0
      %v605 = vadd.f32 %v479, %v604
      %v606 = vpop.f32.mrf.mxu0
      %607 = vmatprep.mubr.f32.mxu0 0.0
      %608 = vmatmul.mubr.f32.gmra.mxu0 %v488
      %v609 = vpop.f32.mrf.mxu0
      %v610 = vadd.f32 %v479, %v609
      %v611 = vpop.f32.mrf.mxu0
      %612 = vmatprep.mubr.f32.mxu0 0.0
      %613 = vmatmul.mubr.f32.gmra.mxu0 %v491
      %v614 = vpop.f32.mrf.mxu0
      %v615 = vadd.f32 %v479, %v614
      %v616 = vpop.f32.mrf.mxu0
      %617 = vmatprep.mubr.f32.mxu0 0.0
      %618 = vmatmul.mubr.f32.gmra.mxu0 %v494
      %v619 = vpop.f32.mrf.mxu0
      %v620 = vadd.f32 %v479, %v619
      %v621 = vpop.f32.mrf.mxu0
      %622 = vmatprep.mubr.f32.mxu0 0.0
      %623 = vmatmul.mubr.f32.gmra.mxu0 %v497
      %v624 = vpop.f32.mrf.mxu0
      %v625 = vadd.f32 %v479, %v624
      %v626 = vpop.f32.mrf.mxu0
      %627 = vmatprep.mubr.f32.mxu0 0.0
      %628 = vmatmul.mubr.f32.gmra.mxu0 %v500
      %v629 = vpop.f32.mrf.mxu0
      %v630 = vadd.f32 %v479, %v629
      %v631 = vpop.f32.mrf.mxu0
      %632 = vmatprep.mubr.f32.mxu0 0.0
      %633 = vmatmul.mubr.f32.gmra.mxu0 %v503
      %v634 = vpop.f32.mrf.mxu0
      %v635 = vadd.f32 %v479, %v634
      %v636 = vpop.f32.mrf.mxu0
      %637 = vmatprep.mubr.f32.mxu0 0.0
      %638 = vmatmul.mubr.f32.gmra.mxu0 %v506
      %v639 = vpop.f32.mrf.mxu0
      %v640 = vadd.f32 %v479, %v639
      %v641 = vpop.f32.mrf.mxu0
      %642 = vmatprep.mubr.f32.mxu0 0.0
      %643 = vmatmul.mubr.f32.gmra.mxu0 %v509
      %v644 = vpop.f32.mrf.mxu0
      %v645 = vadd.f32 %v479, %v644
      %v646 = vpop.f32.mrf.mxu0
      %647 = vmatprep.mubr.f32.mxu0 0.0
      %648 = vmatmul.mubr.f32.gmra.mxu0 %v512
      %v649 = vpop.f32.mrf.mxu0
      %v650 = vadd.f32 %v479, %v649
      %v651 = vpop.f32.mrf.mxu0
      %652 = vmatprep.mubr.f32.mxu0 0.0
      %653 = vmatmul.mubr.f32.gmra.mxu0 %v515
      %v654 = vpop.f32.mrf.mxu0
      %v655 = vadd.f32 %v479, %v654
      %v656 = vpop.f32.mrf.mxu0
      %657 = vmatprep.mubr.f32.mxu0 0.0
      %658 = vmatmul.mubr.f32.gmra.mxu0 %v518
      %v659 = vpop.f32.mrf.mxu0
      %v660 = vadd.f32 %v479, %v659
      %v661 = vpop.f32.mrf.mxu0
      %662 = vmatprep.mubr.f32.mxu0 0.0
      %663 = vmatmul.mubr.f32.gmra.mxu0 %v521
      %v664 = vpop.f32.mrf.mxu0
      %v665 = vadd.f32 %v479, %v664
      %v666 = vpop.f32.mrf.mxu0
      %667 = vmatprep.mubr.f32.mxu0 0.0
      %668 = vmatmul.mubr.f32.gmra.mxu0 %v524
      %v669 = vpop.f32.mrf.mxu0
      %v670 = vadd.f32 %v479, %v669
      %v671 = vpop.f32.mrf.mxu0
      %672 = vmatprep.mubr.f32.mxu0 0.0
      %673 = vmatmul.mubr.f32.gmra.mxu0 %v527
      %v674 = vpop.f32.mrf.mxu0
      %v675 = vadd.f32 %v479, %v674
      %v676 = vpop.f32.mrf.mxu0
      %677 = vdwg.mxu0
      %v678 = vmax.f32 %v600, 0.0
      %v679 = vmax.f32 %v605, 0.0
      %v680 = vmax.f32 %v610, 0.0
      %v681 = vmax.f32 %v615, 0.0
      %v682 = vmax.f32 %v620, 0.0
      %v683 = vmax.f32 %v625, 0.0
      %v684 = vmax.f32 %v630, 0.0
      %v685 = vmax.f32 %v635, 0.0
      %v686 = vmax.f32 %v640, 0.0
      %v687 = vmax.f32 %v645, 0.0
      %v688 = vmax.f32 %v650, 0.0
      %v689 = vmax.f32 %v655, 0.0
      %v690 = vmax.f32 %v660, 0.0
      %v691 = vmax.f32 %v665, 0.0
      %v692 = vmax.f32 %v670, 0.0
      %v693 = vmax.f32 %v675, 0.0
      %v694 = vld [vmem:[%s5] sm:$0xff]
      %v695 = vld [vmem:[%s5 + $0x8] sm:$0xff]
      %v696 = vld [vmem:[%s6] sm:$0x1]
      %v698 = vlaneseq
      %v699 = vshrl.u32 %v698, 7
      %v700 = vsub.s32 0, %v699
      %v701 = vrot.slane %v696, %v700
      %vm703 = vcmask 130048
      %v705 = vsel %vm703, %v678, 0
      %v708 = vsel %vm703, %v679, 0
      %v711 = vsel %vm703, %v680, 0
      %v714 = vsel %vm703, %v681, 0
      %v717 = vsel %vm703, %v682, 0
      %v720 = vsel %vm703, %v683, 0
      %v723 = vsel %vm703, %v684, 0
      %v726 = vsel %vm703, %v685, 0
      %v729 = vsel %vm703, %v686, 0
      %v732 = vsel %vm703, %v687, 0
      %v735 = vsel %vm703, %v688, 0
      %v738 = vsel %vm703, %v689, 0
      %v741 = vsel %vm703, %v690, 0
      %v744 = vsel %vm703, %v691, 0
      %v747 = vsel %vm703, %v692, 0
      %v750 = vsel %vm703, %v693, 0
      %752 = vmatprep.subr.mxu0 0.0
      %753 = vmatpush1.msra.mxu0 0.0
      %754 = vmatprep.subr.mxu0 0.0
      %755 = vmatpush1.msra.mxu0 0.0
      %756 = vmatprep.subr.mxu0 0.0
      %757 = vmatpush1.msra.mxu0 0.0
      %758 = vmatprep.subr.mxu0 0.0
      %759 = vmatpush1.msra.mxu0 0.0
      %760 = vmatprep.subr.mxu0 0.0
      %761 = vmatpush1.msra.mxu0 0.0
      %762 = vmatprep.subr.mxu0 0.0
      %763 = vmatpush1.msra.mxu0 0.0
      %764 = vmatprep.subr.mxu0 0.0
      %765 = vmatpush1.msra.mxu0 0.0
      %766 = vmatprep.subr.mxu0 0.0
      %767 = vmatpush1.msra.mxu0 0.0
      %768 = vmatprep.subr.mxu0 0.0
      %769 = vmatpush1.msra.mxu0 0.0
      %770 = vmatprep.subr.mxu0 0.0
      %771 = vmatpush1.msra.mxu0 0.0
      %772 = vmatprep.subr.mxu0 0.0
      %773 = vmatpush1.msra.mxu0 0.0
      %774 = vmatprep.subr.mxu0 0.0
      %775 = vmatpush1.msra.mxu0 0.0
      %776 = vmatprep.subr.mxu0 0.0
      %777 = vmatpush1.msra.mxu0 0.0
      %778 = vmatprep.subr.mxu0 0.0
      %779 = vmatpush1.msra.mxu0 0.0
      %780 = vmatprep.subr.mxu0 0.0
      %781 = vmatpush1.msra.mxu0 %v695
      %782 = vmatprep.subr.mxu0 0.0
      %783 = vmatpush1.msra.mxu0 %v694
      %784 = vmatprep.subr.mxu0 0.0
      %785 = vmatpush2.msra.mxu0 0.0
      %786 = vmatprep.subr.mxu0 0.0
      %787 = vmatpush2.msra.mxu0 0.0
      %788 = vmatprep.subr.mxu0 0.0
      %789 = vmatpush2.msra.mxu0 0.0
      %790 = vmatprep.subr.mxu0 0.0
      %791 = vmatpush2.msra.mxu0 0.0
      %792 = vmatprep.subr.mxu0 0.0
      %793 = vmatpush2.msra.mxu0 0.0
      %794 = vmatprep.subr.mxu0 0.0
      %795 = vmatpush2.msra.mxu0 0.0
      %796 = vmatprep.subr.mxu0 0.0
      %797 = vmatpush2.msra.mxu0 0.0
      %798 = vmatprep.subr.mxu0 0.0
      %799 = vmatpush2.msra.mxu0 0.0
      %800 = vmatprep.subr.mxu0 0.0
      %801 = vmatpush2.msra.mxu0 0.0
      %802 = vmatprep.subr.mxu0 0.0
      %803 = vmatpush2.msra.mxu0 0.0
      %804 = vmatprep.subr.mxu0 0.0
      %805 = vmatpush2.msra.mxu0 0.0
      %806 = vmatprep.subr.mxu0 0.0
      %807 = vmatpush2.msra.mxu0 0.0
      %808 = vmatprep.subr.mxu0 0.0
      %809 = vmatpush2.msra.mxu0 0.0
      %810 = vmatprep.subr.mxu0 0.0
      %811 = vmatpush2.msra.mxu0 0.0
      %812 = vmatprep.subr.mxu0 0.0
      %813 = vmatpush2.msra.mxu0 0.0
      %814 = vmatprep.subr.mxu0 0.0
      %815 = vmatpush2.msra.mxu0 0.0
      %816 = vmatprep.mubr.f32.mxu0 0.0
      %817 = vmatmul.mubr.f32.gmra.mxu0 %v705
      %v818 = vpop.f32.mrf.mxu0
      %v819 = vadd.f32 %v701, %v818
      %v820 = vpop.f32.mrf.mxu0
      %821 = vmatprep.mubr.f32.mxu0 0.0
      %822 = vmatmul.mubr.f32.gmra.mxu0 %v708
      %v823 = vpop.f32.mrf.mxu0
      %v824 = vadd.f32 %v701, %v823
      %v825 = vpop.f32.mrf.mxu0
      %826 = vmatprep.mubr.f32.mxu0 0.0
      %827 = vmatmul.mubr.f32.gmra.mxu0 %v711
      %v828 = vpop.f32.mrf.mxu0
      %v829 = vadd.f32 %v701, %v828
      %v830 = vpop.f32.mrf.mxu0
      %831 = vmatprep.mubr.f32.mxu0 0.0
      %832 = vmatmul.mubr.f32.gmra.mxu0 %v714
      %v833 = vpop.f32.mrf.mxu0
      %v834 = vadd.f32 %v701, %v833
      %v835 = vpop.f32.mrf.mxu0
      %836 = vmatprep.mubr.f32.mxu0 0.0
      %837 = vmatmul.mubr.f32.gmra.mxu0 %v717
      %v838 = vpop.f32.mrf.mxu0
      %v839 = vadd.f32 %v701, %v838
      %v840 = vpop.f32.mrf.mxu0
      %841 = vmatprep.mubr.f32.mxu0 0.0
      %842 = vmatmul.mubr.f32.gmra.mxu0 %v720
      %v843 = vpop.f32.mrf.mxu0
      %v844 = vadd.f32 %v701, %v843
      %v845 = vpop.f32.mrf.mxu0
      %846 = vmatprep.mubr.f32.mxu0 0.0
      %847 = vmatmul.mubr.f32.gmra.mxu0 %v723
      %v848 = vpop.f32.mrf.mxu0
      %v849 = vadd.f32 %v701, %v848
      %v850 = vpop.f32.mrf.mxu0
      %851 = vmatprep.mubr.f32.mxu0 0.0
      %852 = vmatmul.mubr.f32.gmra.mxu0 %v726
      %v853 = vpop.f32.mrf.mxu0
      %v854 = vadd.f32 %v701, %v853
      %v855 = vpop.f32.mrf.mxu0
      %856 = vmatprep.mubr.f32.mxu0 0.0
      %857 = vmatmul.mubr.f32.gmra.mxu0 %v729
      %v858 = vpop.f32.mrf.mxu0
      %v859 = vadd.f32 %v701, %v858
      %v860 = vpop.f32.mrf.mxu0
      %861 = vmatprep.mubr.f32.mxu0 0.0
      %862 = vmatmul.mubr.f32.gmra.mxu0 %v732
      %v863 = vpop.f32.mrf.mxu0
      %v864 = vadd.f32 %v701, %v863
      %v865 = vpop.f32.mrf.mxu0
      %866 = vmatprep.mubr.f32.mxu0 0.0
      %867 = vmatmul.mubr.f32.gmra.mxu0 %v735
      %v868 = vpop.f32.mrf.mxu0
      %v869 = vadd.f32 %v701, %v868
      %v870 = vpop.f32.mrf.mxu0
      %871 = vmatprep.mubr.f32.mxu0 0.0
      %872 = vmatmul.mubr.f32.gmra.mxu0 %v738
      %v873 = vpop.f32.mrf.mxu0
      %v874 = vadd.f32 %v701, %v873
      %v875 = vpop.f32.mrf.mxu0
      %876 = vmatprep.mubr.f32.mxu0 0.0
      %877 = vmatmul.mubr.f32.gmra.mxu0 %v741
      %v878 = vpop.f32.mrf.mxu0
      %v879 = vadd.f32 %v701, %v878
      %v880 = vpop.f32.mrf.mxu0
      %881 = vmatprep.mubr.f32.mxu0 0.0
      %882 = vmatmul.mubr.f32.gmra.mxu0 %v744
      %v883 = vpop.f32.mrf.mxu0
      %v884 = vadd.f32 %v701, %v883
      %v885 = vpop.f32.mrf.mxu0
      %886 = vmatprep.mubr.f32.mxu0 0.0
      %887 = vmatmul.mubr.f32.gmra.mxu0 %v747
      %v888 = vpop.f32.mrf.mxu0
      %v889 = vadd.f32 %v701, %v888
      %v890 = vpop.f32.mrf.mxu0
      %891 = vmatprep.mubr.f32.mxu0 0.0
      %892 = vmatmul.mubr.f32.gmra.mxu0 %v750
      %v893 = vpop.f32.mrf.mxu0
      %v894 = vadd.f32 %v701, %v893
      %v895 = vpop.f32.mrf.mxu0
      %896 = vdwg.mxu0
      %v897 = vmax.f32 %v819, 0.0
      %v898 = vmax.f32 %v824, 0.0
      %v899 = vmax.f32 %v829, 0.0
      %v900 = vmax.f32 %v834, 0.0
      %v901 = vmax.f32 %v839, 0.0
      %v902 = vmax.f32 %v844, 0.0
      %v903 = vmax.f32 %v849, 0.0
      %v904 = vmax.f32 %v854, 0.0
      %v905 = vmax.f32 %v859, 0.0
      %v906 = vmax.f32 %v864, 0.0
      %v907 = vmax.f32 %v869, 0.0
      %v908 = vmax.f32 %v874, 0.0
      %v909 = vmax.f32 %v879, 0.0
      %v910 = vmax.f32 %v884, 0.0
      %v911 = vmax.f32 %v889, 0.0
      %v912 = vmax.f32 %v894, 0.0
      %v913 = vld [vmem:[%s7] sm:$0xff]
      %v914 = vld [vmem:[%s7 + $0x8] sm:$0xff]
      %v915 = vld [vmem:[%s8] sm:$0x1]
      %v917 = vlaneseq
      %v918 = vshrl.u32 %v917, 7
      %v919 = vsub.s32 0, %v918
      %v920 = vrot.slane %v915, %v919
      %v923 = vsel %vm703, %v897, 0
      %v926 = vsel %vm703, %v898, 0
      %v929 = vsel %vm703, %v899, 0
      %v932 = vsel %vm703, %v900, 0
      %v935 = vsel %vm703, %v901, 0
      %v938 = vsel %vm703, %v902, 0
      %v941 = vsel %vm703, %v903, 0
      %v944 = vsel %vm703, %v904, 0
      %v947 = vsel %vm703, %v905, 0
      %v950 = vsel %vm703, %v906, 0
      %v953 = vsel %vm703, %v907, 0
      %v956 = vsel %vm703, %v908, 0
      %v959 = vsel %vm703, %v909, 0
      %v962 = vsel %vm703, %v910, 0
      %v965 = vsel %vm703, %v911, 0
      %v968 = vsel %vm703, %v912, 0
      %970 = vmatprep.subr.mxu0 0.0
      %971 = vmatpush1.msra.mxu0 0.0
      %972 = vmatprep.subr.mxu0 0.0
      %973 = vmatpush1.msra.mxu0 0.0
      %974 = vmatprep.subr.mxu0 0.0
      %975 = vmatpush1.msra.mxu0 0.0
      %976 = vmatprep.subr.mxu0 0.0
      %977 = vmatpush1.msra.mxu0 0.0
      %978 = vmatprep.subr.mxu0 0.0
      %979 = vmatpush1.msra.mxu0 0.0
      %980 = vmatprep.subr.mxu0 0.0
      %981 = vmatpush1.msra.mxu0 0.0
      %982 = vmatprep.subr.mxu0 0.0
      %983 = vmatpush1.msra.mxu0 0.0
      %984 = vmatprep.subr.mxu0 0.0
      %985 = vmatpush1.msra.mxu0 0.0
      %986 = vmatprep.subr.mxu0 0.0
      %987 = vmatpush1.msra.mxu0 0.0
      %988 = vmatprep.subr.mxu0 0.0
      %989 = vmatpush1.msra.mxu0 0.0
      %990 = vmatprep.subr.mxu0 0.0
      %991 = vmatpush1.msra.mxu0 0.0
      %992 = vmatprep.subr.mxu0 0.0
      %993 = vmatpush1.msra.mxu0 0.0
      %994 = vmatprep.subr.mxu0 0.0
      %995 = vmatpush1.msra.mxu0 0.0
      %996 = vmatprep.subr.mxu0 0.0
      %997 = vmatpush1.msra.mxu0 0.0
      %998 = vmatprep.subr.mxu0 0.0
      %999 = vmatpush1.msra.mxu0 %v914
      %1000 = vmatprep.subr.mxu0 0.0
      %1001 = vmatpush1.msra.mxu0 %v913
      %1002 = vmatprep.subr.mxu0 0.0
      %1003 = vmatpush2.msra.mxu0 0.0
      %1004 = vmatprep.subr.mxu0 0.0
      %1005 = vmatpush2.msra.mxu0 0.0
      %1006 = vmatprep.subr.mxu0 0.0
      %1007 = vmatpush2.msra.mxu0 0.0
      %1008 = vmatprep.subr.mxu0 0.0
      %1009 = vmatpush2.msra.mxu0 0.0
      %1010 = vmatprep.subr.mxu0 0.0
      %1011 = vmatpush2.msra.mxu0 0.0
      %1012 = vmatprep.subr.mxu0 0.0
      %1013 = vmatpush2.msra.mxu0 0.0
      %1014 = vmatprep.subr.mxu0 0.0
      %1015 = vmatpush2.msra.mxu0 0.0
      %1016 = vmatprep.subr.mxu0 0.0
      %1017 = vmatpush2.msra.mxu0 0.0
      %1018 = vmatprep.subr.mxu0 0.0
      %1019 = vmatpush2.msra.mxu0 0.0
      %1020 = vmatprep.subr.mxu0 0.0
      %1021 = vmatpush2.msra.mxu0 0.0
      %1022 = vmatprep.subr.mxu0 0.0
      %1023 = vmatpush2.msra.mxu0 0.0
      %1024 = vmatprep.subr.mxu0 0.0
      %1025 = vmatpush2.msra.mxu0 0.0
      %1026 = vmatprep.subr.mxu0 0.0
      %1027 = vmatpush2.msra.mxu0 0.0
      %1028 = vmatprep.subr.mxu0 0.0
      %1029 = vmatpush2.msra.mxu0 0.0
      %1030 = vmatprep.subr.mxu0 0.0
      %1031 = vmatpush2.msra.mxu0 0.0
      %1032 = vmatprep.subr.mxu0 0.0
      %1033 = vmatpush2.msra.mxu0 0.0
      %1034 = vmatprep.mubr.f32.mxu0 0.0
      %1035 = vmatmul.mubr.f32.gmra.mxu0 %v923
      %v1036 = vpop.f32.mrf.mxu0
      %v1037 = vadd.f32 %v920, %v1036
      %v1038 = vpop.f32.mrf.mxu0
      %1039 = vmatprep.mubr.f32.mxu0 0.0
      %1040 = vmatmul.mubr.f32.gmra.mxu0 %v926
      %v1041 = vpop.f32.mrf.mxu0
      %v1042 = vadd.f32 %v920, %v1041
      %v1043 = vpop.f32.mrf.mxu0
      %1044 = vmatprep.mubr.f32.mxu0 0.0
      %1045 = vmatmul.mubr.f32.gmra.mxu0 %v929
      %v1046 = vpop.f32.mrf.mxu0
      %v1047 = vadd.f32 %v920, %v1046
      %v1048 = vpop.f32.mrf.mxu0
      %1049 = vmatprep.mubr.f32.mxu0 0.0
      %1050 = vmatmul.mubr.f32.gmra.mxu0 %v932
      %v1051 = vpop.f32.mrf.mxu0
      %v1052 = vadd.f32 %v920, %v1051
      %v1053 = vpop.f32.mrf.mxu0
      %1054 = vmatprep.mubr.f32.mxu0 0.0
      %1055 = vmatmul.mubr.f32.gmra.mxu0 %v935
      %v1056 = vpop.f32.mrf.mxu0
      %v1057 = vadd.f32 %v920, %v1056
      %v1058 = vpop.f32.mrf.mxu0
      %1059 = vmatprep.mubr.f32.mxu0 0.0
      %1060 = vmatmul.mubr.f32.gmra.mxu0 %v938
      %v1061 = vpop.f32.mrf.mxu0
      %v1062 = vadd.f32 %v920, %v1061
      %v1063 = vpop.f32.mrf.mxu0
      %1064 = vmatprep.mubr.f32.mxu0 0.0
      %1065 = vmatmul.mubr.f32.gmra.mxu0 %v941
      %v1066 = vpop.f32.mrf.mxu0
      %v1067 = vadd.f32 %v920, %v1066
      %v1068 = vpop.f32.mrf.mxu0
      %1069 = vmatprep.mubr.f32.mxu0 0.0
      %1070 = vmatmul.mubr.f32.gmra.mxu0 %v944
      %v1071 = vpop.f32.mrf.mxu0
      %v1072 = vadd.f32 %v920, %v1071
      %v1073 = vpop.f32.mrf.mxu0
      %1074 = vmatprep.mubr.f32.mxu0 0.0
      %1075 = vmatmul.mubr.f32.gmra.mxu0 %v947
      %v1076 = vpop.f32.mrf.mxu0
      %v1077 = vadd.f32 %v920, %v1076
      %v1078 = vpop.f32.mrf.mxu0
      %1079 = vmatprep.mubr.f32.mxu0 0.0
      %1080 = vmatmul.mubr.f32.gmra.mxu0 %v950
      %v1081 = vpop.f32.mrf.mxu0
      %v1082 = vadd.f32 %v920, %v1081
      %v1083 = vpop.f32.mrf.mxu0
      %1084 = vmatprep.mubr.f32.mxu0 0.0
      %1085 = vmatmul.mubr.f32.gmra.mxu0 %v953
      %v1086 = vpop.f32.mrf.mxu0
      %v1087 = vadd.f32 %v920, %v1086
      %v1088 = vpop.f32.mrf.mxu0
      %1089 = vmatprep.mubr.f32.mxu0 0.0
      %1090 = vmatmul.mubr.f32.gmra.mxu0 %v956
      %v1091 = vpop.f32.mrf.mxu0
      %v1092 = vadd.f32 %v920, %v1091
      %v1093 = vpop.f32.mrf.mxu0
      %1094 = vmatprep.mubr.f32.mxu0 0.0
      %1095 = vmatmul.mubr.f32.gmra.mxu0 %v959
      %v1096 = vpop.f32.mrf.mxu0
      %v1097 = vadd.f32 %v920, %v1096
      %v1098 = vpop.f32.mrf.mxu0
      %1099 = vmatprep.mubr.f32.mxu0 0.0
      %1100 = vmatmul.mubr.f32.gmra.mxu0 %v962
      %v1101 = vpop.f32.mrf.mxu0
      %v1102 = vadd.f32 %v920, %v1101
      %v1103 = vpop.f32.mrf.mxu0
      %1104 = vmatprep.mubr.f32.mxu0 0.0
      %1105 = vmatmul.mubr.f32.gmra.mxu0 %v965
      %v1106 = vpop.f32.mrf.mxu0
      %v1107 = vadd.f32 %v920, %v1106
      %v1108 = vpop.f32.mrf.mxu0
      %1109 = vmatprep.mubr.f32.mxu0 0.0
      %1110 = vmatmul.mubr.f32.gmra.mxu0 %v968
      %v1111 = vpop.f32.mrf.mxu0
      %v1112 = vadd.f32 %v920, %v1111
      %v1113 = vpop.f32.mrf.mxu0
      %1114 = vdwg.mxu0
      %v1115 = vmax.f32 %v1037, 0.0
      %v1116 = vmax.f32 %v1042, 0.0
      %v1117 = vmax.f32 %v1047, 0.0
      %v1118 = vmax.f32 %v1052, 0.0
      %v1119 = vmax.f32 %v1057, 0.0
      %v1120 = vmax.f32 %v1062, 0.0
      %v1121 = vmax.f32 %v1067, 0.0
      %v1122 = vmax.f32 %v1072, 0.0
      %v1123 = vmax.f32 %v1077, 0.0
      %v1124 = vmax.f32 %v1082, 0.0
      %v1125 = vmax.f32 %v1087, 0.0
      %v1126 = vmax.f32 %v1092, 0.0
      %v1127 = vmax.f32 %v1097, 0.0
      %v1128 = vmax.f32 %v1102, 0.0
      %v1129 = vmax.f32 %v1107, 0.0
      %v1130 = vmax.f32 %v1112, 0.0
      %v1131 = vld [vmem:[%s9] sm:$0x1]
      %v1133 = vlaneseq
      %v1134 = vshrl.u32 %v1133, 7
      %v1135 = vsub.s32 0, %v1134
      %v1136 = vrot.slane %v1131, %v1135
      %v1138 = vmul.f32 %v1115, %v1136
      %v1139 = vmul.f32 %v1116, %v1136
      %v1140 = vmul.f32 %v1117, %v1136
      %v1141 = vmul.f32 %v1118, %v1136
      %v1142 = vmul.f32 %v1119, %v1136
      %v1143 = vmul.f32 %v1120, %v1136
      %v1144 = vmul.f32 %v1121, %v1136
      %v1145 = vmul.f32 %v1122, %v1136
      %v1146 = vmul.f32 %v1123, %v1136
      %v1147 = vmul.f32 %v1124, %v1136
      %v1148 = vmul.f32 %v1125, %v1136
      %v1149 = vmul.f32 %v1126, %v1136
      %v1150 = vmul.f32 %v1127, %v1136
      %v1151 = vmul.f32 %v1128, %v1136
      %v1152 = vmul.f32 %v1129, %v1136
      %v1153 = vmul.f32 %v1130, %v1136
      %vm1154 = vcmask 261120
      %v1155 = vsel %vm1154, %v1138, 0.0
      %1156 = vadd.xlane.f32.xlu0 %v1155
      %v1157 = vpop.xlane.xlu0 %1156
      %v1158 = vsel %vm1154, %v1139, 0.0
      %1159 = vadd.xlane.f32.xlu0 %v1158
      %v1160 = vpop.xlane.xlu0 %1159
      %v1161 = vsel %vm1154, %v1140, 0.0
      %1162 = vadd.xlane.f32.xlu0 %v1161
      %v1163 = vpop.xlane.xlu0 %1162
      %v1164 = vsel %vm1154, %v1141, 0.0
      %1165 = vadd.xlane.f32.xlu0 %v1164
      %v1166 = vpop.xlane.xlu0 %1165
      %v1167 = vsel %vm1154, %v1142, 0.0
      %1168 = vadd.xlane.f32.xlu0 %v1167
      %v1169 = vpop.xlane.xlu0 %1168
      %v1170 = vsel %vm1154, %v1143, 0.0
      %1171 = vadd.xlane.f32.xlu0 %v1170
      %v1172 = vpop.xlane.xlu0 %1171
      %v1173 = vsel %vm1154, %v1144, 0.0
      %1174 = vadd.xlane.f32.xlu0 %v1173
      %v1175 = vpop.xlane.xlu0 %1174
      %v1176 = vsel %vm1154, %v1145, 0.0
      %1177 = vadd.xlane.f32.xlu0 %v1176
      %v1178 = vpop.xlane.xlu0 %1177
      %v1179 = vsel %vm1154, %v1146, 0.0
      %1180 = vadd.xlane.f32.xlu0 %v1179
      %v1181 = vpop.xlane.xlu0 %1180
      %v1182 = vsel %vm1154, %v1147, 0.0
      %1183 = vadd.xlane.f32.xlu0 %v1182
      %v1184 = vpop.xlane.xlu0 %1183
      %v1185 = vsel %vm1154, %v1148, 0.0
      %1186 = vadd.xlane.f32.xlu0 %v1185
      %v1187 = vpop.xlane.xlu0 %1186
      %v1188 = vsel %vm1154, %v1149, 0.0
      %1189 = vadd.xlane.f32.xlu0 %v1188
      %v1190 = vpop.xlane.xlu0 %1189
      %v1191 = vsel %vm1154, %v1150, 0.0
      %1192 = vadd.xlane.f32.xlu0 %v1191
      %v1193 = vpop.xlane.xlu0 %1192
      %v1194 = vsel %vm1154, %v1151, 0.0
      %1195 = vadd.xlane.f32.xlu0 %v1194
      %v1196 = vpop.xlane.xlu0 %1195
      %v1197 = vsel %vm1154, %v1152, 0.0
      %1198 = vadd.xlane.f32.xlu0 %v1197
      %v1199 = vpop.xlane.xlu0 %1198
      %v1200 = vsel %vm1154, %v1153, 0.0
      %1201 = vadd.xlane.f32.xlu0 %v1200
      %v1202 = vpop.xlane.xlu0 %1201
      %v1203 = vld [vmem:[#allocation3] sm:$0x1]
      %v1205 = vlaneseq
      %v1206 = vshrl.u32 %v1205, 7
      %v1207 = vsub.s32 0, %v1206
      %v1208 = vrot.slane %v1203, %v1207
      %v1210 = vadd.f32 %v1157, %v1208
      %v1211 = vadd.f32 %v1160, %v1208
      %v1212 = vadd.f32 %v1163, %v1208
      %v1213 = vadd.f32 %v1166, %v1208
      %v1214 = vadd.f32 %v1169, %v1208
      %v1215 = vadd.f32 %v1172, %v1208
      %v1216 = vadd.f32 %v1175, %v1208
      %v1217 = vadd.f32 %v1178, %v1208
      %v1218 = vadd.f32 %v1181, %v1208
      %v1219 = vadd.f32 %v1184, %v1208
      %v1220 = vadd.f32 %v1187, %v1208
      %v1221 = vadd.f32 %v1190, %v1208
      %v1222 = vadd.f32 %v1193, %v1208
      %v1223 = vadd.f32 %v1196, %v1208
      %v1224 = vadd.f32 %v1199, %v1208
      %v1225 = vadd.f32 %v1202, %v1208
      %v1226 = vxor.u32 %v1210, 2147483648
      %v1227 = vxor.u32 %v1211, 2147483648
      %v1228 = vxor.u32 %v1212, 2147483648
      %v1229 = vxor.u32 %v1213, 2147483648
      %v1230 = vxor.u32 %v1214, 2147483648
      %v1231 = vxor.u32 %v1215, 2147483648
      %v1232 = vxor.u32 %v1216, 2147483648
      %v1233 = vxor.u32 %v1217, 2147483648
      %v1234 = vxor.u32 %v1218, 2147483648
      %v1235 = vxor.u32 %v1219, 2147483648
      %v1236 = vxor.u32 %v1220, 2147483648
      %v1237 = vxor.u32 %v1221, 2147483648
      %v1238 = vxor.u32 %v1222, 2147483648
      %v1239 = vxor.u32 %v1223, 2147483648
      %v1240 = vxor.u32 %v1224, 2147483648
      %v1241 = vxor.u32 %v1225, 2147483648
      %v1242 = vmul.f32 %v1226, 1.442695
      %v1243 = vpow.pop %v1242
      %v1244 = vmul.f32 %v1227, 1.442695
      %v1245 = vpow.pop %v1244
      %v1246 = vmul.f32 %v1228, 1.442695
      %v1247 = vpow.pop %v1246
      %v1248 = vmul.f32 %v1229, 1.442695
      %v1249 = vpow.pop %v1248
      %v1250 = vmul.f32 %v1230, 1.442695
      %v1251 = vpow.pop %v1250
      %v1252 = vmul.f32 %v1231, 1.442695
      %v1253 = vpow.pop %v1252
      %v1254 = vmul.f32 %v1232, 1.442695
      %v1255 = vpow.pop %v1254
      %v1256 = vmul.f32 %v1233, 1.442695
      %v1257 = vpow.pop %v1256
      %v1258 = vmul.f32 %v1234, 1.442695
      %v1259 = vpow.pop %v1258
      %v1260 = vmul.f32 %v1235, 1.442695
      %v1261 = vpow.pop %v1260
      %v1262 = vmul.f32 %v1236, 1.442695
      %v1263 = vpow.pop %v1262
      %v1264 = vmul.f32 %v1237, 1.442695
      %v1265 = vpow.pop %v1264
      %v1266 = vmul.f32 %v1238, 1.442695
      %v1267 = vpow.pop %v1266
      %v1268 = vmul.f32 %v1239, 1.442695
      %v1269 = vpow.pop %v1268
      %v1270 = vmul.f32 %v1240, 1.442695
      %v1271 = vpow.pop %v1270
      %v1272 = vmul.f32 %v1241, 1.442695
      %v1273 = vpow.pop %v1272
      %v1274 = vadd.f32 %v1243, 1.0
      %v1275 = vadd.f32 %v1245, 1.0
      %v1276 = vadd.f32 %v1247, 1.0
      %v1277 = vadd.f32 %v1249, 1.0
      %v1278 = vadd.f32 %v1251, 1.0
      %v1279 = vadd.f32 %v1253, 1.0
      %v1280 = vadd.f32 %v1255, 1.0
      %v1281 = vadd.f32 %v1257, 1.0
      %v1282 = vadd.f32 %v1259, 1.0
      %v1283 = vadd.f32 %v1261, 1.0
      %v1284 = vadd.f32 %v1263, 1.0
      %v1285 = vadd.f32 %v1265, 1.0
      %v1286 = vadd.f32 %v1267, 1.0
      %v1287 = vadd.f32 %v1269, 1.0
      %v1288 = vadd.f32 %v1271, 1.0
      %v1289 = vadd.f32 %v1273, 1.0
      %v1290 = vrcp.pop %v1274
      %v1291 = vmul.f32 1.0, %v1290
      %v1292 = vrcp.pop %v1275
      %v1293 = vmul.f32 1.0, %v1292
      %v1294 = vrcp.pop %v1276
      %v1295 = vmul.f32 1.0, %v1294
      %v1296 = vrcp.pop %v1277
      %v1297 = vmul.f32 1.0, %v1296
      %v1298 = vrcp.pop %v1278
      %v1299 = vmul.f32 1.0, %v1298
      %v1300 = vrcp.pop %v1279
      %v1301 = vmul.f32 1.0, %v1300
      %v1302 = vrcp.pop %v1280
      %v1303 = vmul.f32 1.0, %v1302
      %v1304 = vrcp.pop %v1281
      %v1305 = vmul.f32 1.0, %v1304
      %v1306 = vrcp.pop %v1282
      %v1307 = vmul.f32 1.0, %v1306
      %v1308 = vrcp.pop %v1283
      %v1309 = vmul.f32 1.0, %v1308
      %v1310 = vrcp.pop %v1284
      %v1311 = vmul.f32 1.0, %v1310
      %v1312 = vrcp.pop %v1285
      %v1313 = vmul.f32 1.0, %v1312
      %v1314 = vrcp.pop %v1286
      %v1315 = vmul.f32 1.0, %v1314
      %v1316 = vrcp.pop %v1287
      %v1317 = vmul.f32 1.0, %v1316
      %v1318 = vrcp.pop %v1288
      %v1319 = vmul.f32 1.0, %v1318
      %v1320 = vrcp.pop %v1289
      %v1321 = vmul.f32 1.0, %v1320
      %1323 = vset.pattern.permute.xlu0 0
      %1324 = vperm.xlu0 %1323, %v1291
      %v1325 = vpop.permute.xlu0 %1324
      %1328 = vset.pattern.permute.xlu0 0
      %1329 = vperm.xlu0 %1328, %v1293
      %v1330 = vpop.permute.xlu0 %1329
      %1333 = vset.pattern.permute.xlu0 0
      %1334 = vperm.xlu0 %1333, %v1295
      %v1335 = vpop.permute.xlu0 %1334
      %1338 = vset.pattern.permute.xlu0 0
      %1339 = vperm.xlu0 %1338, %v1297
      %v1340 = vpop.permute.xlu0 %1339
      %1343 = vset.pattern.permute.xlu0 0
      %1344 = vperm.xlu0 %1343, %v1299
      %v1345 = vpop.permute.xlu0 %1344
      %1348 = vset.pattern.permute.xlu0 0
      %1349 = vperm.xlu0 %1348, %v1301
      %v1350 = vpop.permute.xlu0 %1349
      %1353 = vset.pattern.permute.xlu0 0
      %1354 = vperm.xlu0 %1353, %v1303
      %v1355 = vpop.permute.xlu0 %1354
      %1358 = vset.pattern.permute.xlu0 0
      %1359 = vperm.xlu0 %1358, %v1305
      %v1360 = vpop.permute.xlu0 %1359
      %1363 = vset.pattern.permute.xlu0 0
      %1364 = vperm.xlu0 %1363, %v1307
      %v1365 = vpop.permute.xlu0 %1364
      %1368 = vset.pattern.permute.xlu0 0
      %1369 = vperm.xlu0 %1368, %v1309
      %v1370 = vpop.permute.xlu0 %1369
      %1373 = vset.pattern.permute.xlu0 0
      %1374 = vperm.xlu0 %1373, %v1311
      %v1375 = vpop.permute.xlu0 %1374
      %1378 = vset.pattern.permute.xlu0 0
      %1379 = vperm.xlu0 %1378, %v1313
      %v1380 = vpop.permute.xlu0 %1379
      %1383 = vset.pattern.permute.xlu0 0
      %1384 = vperm.xlu0 %1383, %v1315
      %v1385 = vpop.permute.xlu0 %1384
      %1388 = vset.pattern.permute.xlu0 0
      %1389 = vperm.xlu0 %1388, %v1317
      %v1390 = vpop.permute.xlu0 %1389
      %1393 = vset.pattern.permute.xlu0 0
      %1394 = vperm.xlu0 %1393, %v1319
      %v1395 = vpop.permute.xlu0 %1394
      %1398 = vset.pattern.permute.xlu0 0
      %1399 = vperm.xlu0 %1398, %v1321
      %v1400 = vpop.permute.xlu0 %1399
      %1402 = vst [vmem:[#allocation4] sm:$0xff] %v1325
      %1403 = vst [vmem:[#allocation4 + $0x8] sm:$0xff] %v1330
      %1404 = vst [vmem:[#allocation4 + $0x10] sm:$0xff] %v1335
      %1405 = vst [vmem:[#allocation4 + $0x18] sm:$0xff] %v1340
      %1406 = vst [vmem:[#allocation4 + $0x20] sm:$0xff] %v1345
      %1407 = vst [vmem:[#allocation4 + $0x28] sm:$0xff] %v1350
      %1408 = vst [vmem:[#allocation4 + $0x30] sm:$0xff] %v1355
      %1409 = vst [vmem:[#allocation4 + $0x38] sm:$0xff] %v1360
      %1410 = vst [vmem:[#allocation4 + $0x40] sm:$0xff] %v1365
      %1411 = vst [vmem:[#allocation4 + $0x48] sm:$0xff] %v1370
      %1412 = vst [vmem:[#allocation4 + $0x50] sm:$0xff] %v1375
      %1413 = vst [vmem:[#allocation4 + $0x58] sm:$0xff] %v1380
      %1414 = vst [vmem:[#allocation4 + $0x60] sm:$0xff] %v1385
      %1415 = vst [vmem:[#allocation4 + $0x68] sm:$0xff] %v1390
      %1416 = vst [vmem:[#allocation4 + $0x70] sm:$0xff] %v1395
      %1417 = vst [vmem:[#allocation4 + $0x78] sm:$0xff] %v1400
    $region53: #{tpu_custom_call.1} parent=1 // pred_fallthru
      _
    // Predicated region
    $region54: #{tpu_custom_call.1} parent=1 // pred_check
      _
    $region55: #{tpu_custom_call.1} parent=1 // pred_check_branch
      %1419 = sbr.rel (0) target = $region57
    $region56: #{tpu_custom_call.1} parent=1 // pred_region
      %s1421 = ssub.s32 2048, 2048
      %1422 = vsyncadd [#allocation5], %s1421
      %s1423 = sshll.u32 [#allocation4], 4
      %s1424 = int_to_ptr.vmem [resolvable:$true] %s1423
      %1429 = dma.vmem_to_hbm [thread:$0]  %s1424, 2048, %s11, [#allocation5], 128, 128, 8
    $region57: #{tpu_custom_call.1} parent=1 // pred_fallthru
      _
    // Predicated region
    $region58: #{tpu_custom_call.1} parent=1 // pred_check
      _
    $region59: #{tpu_custom_call.1} parent=1 // pred_check_branch
      %1431 = sbr.rel (0) target = $region61
    $region60: #{tpu_custom_call.1} parent=1 // pred_region
      %1432 = dma.done [#allocation5], 2048
    $region61: #{tpu_custom_call.1} parent=1 // pred_fallthru
      _
    %1433 = vsyncpa [#allocation5], 1

</llo_original>
